<compile_context>
chip_gen: v6e
topology: v6e:2x2x1
jax: 0.10.0
libtpu: 0.0.40
codegen_flags: <defaults>
</compile_context>

<pallas_src>
import functools

import jax
import jax.numpy as jnp
from jax.experimental import pallas as pl
from jax.experimental.pallas import tpu as pltpu

LANE = 128
X_SUBLANE = 16          # bf16 (16, 128) sublane quantum for the streamed x tile
MAX_BATCH_TILE = 1024   # amortizes ~0.35us/step pipeline overhead (review item 1)


def calculate_hidden_neurons(input_size, output_size):
    rule_1 = max(input_size, output_size)
    rule_2 = int(2 / 3 * input_size + output_size)
    rule_3 = min(2 * input_size - 1, input_size + input_size // 3)
    hidden_neurons = min(rule_1, rule_2, rule_3)
    print('hidden neurons: ', hidden_neurons)
    return hidden_neurons


def _round_up(x, m):
    return ((x + m - 1) // m) * m


def _mlp_kernel(*refs, num_layers, matmul_dtype):
    """refs = (x_ref, w0, b0, w1, b1, ..., w_{L-1}, b_{L-1}, o_ref).

    x arrives already in matmul_dtype (bf16).  Weights are pre-transposed to
    (in_pad, out_pad) in matmul_dtype; biases are (1, out_pad) f32.  Layers
    0..L-2 are linear + sigmoid, layer L-1 is linear only, matching
    GeneralizedMLP.forward.
    """
    x_ref = refs[0]
    o_ref = refs[-1]
    params = refs[1:-1]
    assert len(params) == 2 * num_layers

    h = x_ref[...]                              # (tb, in_pad) matmul_dtype
    for i in range(num_layers):
        w = params[2 * i][...]                  # (in_pad_i, out_pad_i)
        b = params[2 * i + 1][...]              # (1, out_pad_i) f32
        # MXU matmul: bf16 operands, f32 accumulation; f32 bias-add (VPU).
        h = jnp.dot(h, w, preferred_element_type=jnp.float32) + b
        if i < num_layers - 1:
            # sigmoid(h) == 0.5*(tanh(0.5*h)+1): single EUP op in its own slot.
            h = 0.5 * (jnp.tanh(0.5 * h) + 1.0)
            h = h.astype(matmul_dtype)          # one narrow cast per hidden layer
    o_ref[...] = h.astype(o_ref.dtype)


def prepare_params(weights, biases, input_size, matmul_dtype=jnp.bfloat16):
    """One-time weight preprocessing, hoisted OUT of the forward path.

    weights[i]: (out_i, in_i) torch layout; biases[i]: (out_i,).
    Returns padded/pre-transposed params + metadata.  Zero padding is exact:
    padded hidden lanes become sigmoid(0)=0.5 but multiply zero weight rows of
    the next layer, so they contribute nothing.
    """
    num_layers = len(weights)
    in_pad = _round_up(int(input_size), LANE)
    dims_out = [_round_up(int(w.shape[0]), LANE) for w in weights]
    dims_in = [in_pad] + dims_out[:-1]

    params = []
    for li, (w, b) in enumerate(zip(weights, biases)):
        fan_out, fan_in = int(w.shape[0]), int(w.shape[1])
        ip, op = dims_in[li], dims_out[li]
        w_p = jnp.zeros((ip, op), matmul_dtype).at[:fan_in, :fan_out].set(
            w.T.astype(matmul_dtype))
        b_p = jnp.zeros((1, op), jnp.float32).at[0, :fan_out].set(
            b.astype(jnp.float32))
        params += [w_p, b_p]

    meta = dict(num_layers=num_layers,
                input_size=int(input_size),
                out_features=int(weights[-1].shape[0]),
                in_pad=in_pad,
                dims_in=tuple(dims_in),
                dims_out=tuple(dims_out),
                matmul_dtype=matmul_dtype)
    return tuple(params), meta


def generalized_mlp_forward(x, params, meta, *, out_dtype=None):
    """x: (batch, input_size).  params/meta from prepare_params.
    Computes y = sigmoid(...sigmoid(x W0^T + b0)...) W_L^T + b_L.
    """
    num_layers = meta['num_layers']
    matmul_dtype = meta['matmul_dtype']
    in_pad = meta['in_pad']
    out_pad = meta['dims_out'][-1]
    batch, input_size = x.shape
    assert input_size == meta['input_size']
    if out_dtype is None:
        out_dtype = x.dtype

    # --- batch tiling: pad only to the bf16 sublane quantum, cdiv grid -------
    batch_pad = _round_up(batch, X_SUBLANE)
    tb = min(MAX_BATCH_TILE, batch_pad)
    # v7x: guarantee >=2 grid steps when the batch allows so the "parallel"
    # axis can be sharded across both TensorCores (no effect on v5e/v6e).
    if batch_pad >= 2 * X_SUBLANE and pl.cdiv(batch_pad, tb) < 2:
        tb = _round_up(pl.cdiv(batch_pad, 2), X_SUBLANE)
    grid = (pl.cdiv(batch_pad, tb),)

    # --- stream x in the MXU dtype: halves x DMA bytes, drops in-kernel cast -
    x_p = jnp.zeros((batch_pad, in_pad), matmul_dtype).at[:batch, :input_size].set(
        x.astype(matmul_dtype))

    kernel = functools.partial(_mlp_kernel, num_layers=num_layers,
                               matmul_dtype=matmul_dtype)

    # --- explicit VMEM budget: resident params + streamed x/out tiles --------
    param_bytes = sum(int(p.size) * p.dtype.itemsize for p in params)
    x_tile_bytes = tb * in_pad * jnp.dtype(matmul_dtype).itemsize
    out_tile_bytes = tb * out_pad * jnp.dtype(out_dtype).itemsize
    act_bytes = 4 * tb * max(meta['dims_in'] + meta['dims_out']) * 4  # f32 temps
    vmem_limit = 2 * (2 * param_bytes + 4 * (x_tile_bytes + out_tile_bytes)
                      + act_bytes)
    vmem_limit = int(min(max(vmem_limit, 8 << 20), 64 << 20))  # fits v7x 64 MiB

    def _param_spec(shape, pm):
        if pm is None:
            return pl.BlockSpec(shape, lambda i: (0, 0))
        return pl.BlockSpec(shape, lambda i: (0, 0), pipeline_mode=pm)

    def run(buffered_params):
        # Weights/biases: constant index_map -> VMEM resident across the grid;
        # single-buffer them (they never change) to halve their VMEM footprint.
        pm = pl.Buffered(1) if buffered_params else None
        in_specs = [pl.BlockSpec((tb, in_pad), lambda i: (i, 0))]
        for li in range(num_layers):
            ip, op = meta['dims_in'][li], meta['dims_out'][li]
            in_specs += [_param_spec((ip, op), pm), _param_spec((1, op), pm)]
        return pl.pallas_call(
            kernel,
            out_shape=jax.ShapeDtypeStruct((batch_pad, out_pad), out_dtype),
            grid=grid,
            in_specs=in_specs,
            out_specs=pl.BlockSpec((tb, out_pad), lambda i: (i, 0)),
            compiler_params=pltpu.CompilerParams(
                dimension_semantics=("parallel",),
                vmem_limit_bytes=vmem_limit),
        )(x_p, *params)

    try:
        out_padded = run(buffered_params=True)
    except Exception:
        # Fallback: default (double) buffering for params, still VMEM resident.
        out_padded = run(buffered_params=False)

    # Slice off batch / feature padding outside the kernel.
    return out_padded[:batch, :meta['out_features']]


def init_params(key, input_size, output_size, num_hidden_layers, num_neurons=-1):
    """Deterministic parameter init mirroring nn.Linear's default uniform init."""
    if num_neurons == -1:
        hidden = calculate_hidden_neurons(input_size, output_size)
    else:
        print('Using num_neurons = ', num_neurons)
        hidden = num_neurons

    layer_dims = [(input_size, hidden)]
    for _ in range(num_hidden_layers - 1):
        layer_dims.append((hidden, hidden))
    layer_dims.append((hidden, output_size))  # output layer

    weights, biases = [], []
    for (fan_in, fan_out) in layer_dims:
        key, kw, kb = jax.random.split(key, 3)
        bound = 1.0 / jnp.sqrt(jnp.float32(fan_in))
        w = jax.random.uniform(kw, (fan_out, fan_in), jnp.float32, -bound, bound)
        b = jax.random.uniform(kb, (fan_out,), jnp.float32, -bound, bound)
        weights.append(w)
        biases.append(b)
    return weights, biases


def reference_forward(x, weights, biases, matmul_dtype=None):
    """Pure-JAX reference matching torch semantics; optional bf16 operand
    emulation to mirror the kernel's MXU dtype exactly."""
    h = x.astype(jnp.float32)
    for i, (w, b) in enumerate(zip(weights, biases)):
        if matmul_dtype is not None:
            h = jnp.dot(h.astype(matmul_dtype), w.T.astype(matmul_dtype),
                        preferred_element_type=jnp.float32) + b
        else:
            h = h @ w.T + b
        if i < len(weights) - 1:
            h = jax.nn.sigmoid(h)
    return h


if __name__ == "__main__":
    input_size = 16
    output_size = 4
    num_hidden_layers = 3
    batch = 8

    key = jax.random.PRNGKey(0)
    key, kx = jax.random.split(key)
    x = jax.random.normal(kx, (batch, input_size), jnp.float32)

    weights, biases = init_params(key, input_size, output_size, num_hidden_layers)

    # One-time weight preprocessing (hoisted out of the forward path).
    params, meta = prepare_params(weights, biases, input_size)

    out = generalized_mlp_forward(x, params, meta)
    out = jax.block_until_ready(out)
    assert out.shape == (batch, output_size)

    # Exact-path check: reference with the same bf16 MXU-operand emulation.
    ref_bf16 = reference_forward(x, weights, biases, matmul_dtype=jnp.bfloat16)
    assert jnp.allclose(out, ref_bf16, atol=2e-3, rtol=2e-3), \
        "mismatch vs bf16-emulated reference"

    # Semantics check vs full-f32 torch-equivalent math (loose: bf16 operands).
    ref_f32 = reference_forward(x, weights, biases)
    assert jnp.allclose(out, ref_f32, atol=5e-2, rtol=5e-2), \
        "mismatch vs f32 reference"

    print("KERNEL_OK")
</pallas_src>

<mosaic_0001>
module attributes {stable_mosaic.version = 11 : i64} {
  func.func @_mlp_kernel(%arg0: i32, %arg1: memref<16x128xbf16, #tpu.memory_space<vmem>>, %arg2: memref<128x128xbf16, #tpu.memory_space<vmem>>, %arg3: memref<1x128xf32, #tpu.memory_space<vmem>>, %arg4: memref<128x128xbf16, #tpu.memory_space<vmem>>, %arg5: memref<1x128xf32, #tpu.memory_space<vmem>>, %arg6: memref<128x128xbf16, #tpu.memory_space<vmem>>, %arg7: memref<1x128xf32, #tpu.memory_space<vmem>>, %arg8: memref<128x128xbf16, #tpu.memory_space<vmem>>, %arg9: memref<1x128xf32, #tpu.memory_space<vmem>>, %arg10: memref<16x128xf32, #tpu.memory_space<vmem>>) attributes {dimension_semantics = [#tpu.dimension_semantics<parallel>], iteration_bounds = array<i64: 1>, scalar_prefetch = 0 : i64, scratch_operands = 0 : i64, tpu.core_type = #tpu.core_type<tc>, window_params = [{transform_indices = @transform_0, window_bounds = array<i64: 16, 128>}, {pipeline_mode = #tpu.pipeline_mode<synchronous>, transform_indices = @transform_1, window_bounds = array<i64: 128, 128>}, {pipeline_mode = #tpu.pipeline_mode<synchronous>, transform_indices = @transform_2, window_bounds = array<i64: 1, 128>}, {pipeline_mode = #tpu.pipeline_mode<synchronous>, transform_indices = @transform_3, window_bounds = array<i64: 128, 128>}, {pipeline_mode = #tpu.pipeline_mode<synchronous>, transform_indices = @transform_4, window_bounds = array<i64: 1, 128>}, {pipeline_mode = #tpu.pipeline_mode<synchronous>, transform_indices = @transform_5, window_bounds = array<i64: 128, 128>}, {pipeline_mode = #tpu.pipeline_mode<synchronous>, transform_indices = @transform_6, window_bounds = array<i64: 1, 128>}, {pipeline_mode = #tpu.pipeline_mode<synchronous>, transform_indices = @transform_7, window_bounds = array<i64: 128, 128>}, {pipeline_mode = #tpu.pipeline_mode<synchronous>, transform_indices = @transform_8, window_bounds = array<i64: 1, 128>}, {transform_indices = @transform_9, window_bounds = array<i64: 16, 128>}]} {
    %c0 = arith.constant 0 : index
    %c0_0 = arith.constant 0 : index
    %0 = vector.load %arg1[%c0, %c0_0] : memref<16x128xbf16, #tpu.memory_space<vmem>>, vector<16x128xbf16>
    %c0_1 = arith.constant 0 : index
    %c0_2 = arith.constant 0 : index
    %1 = vector.load %arg2[%c0_1, %c0_2] : memref<128x128xbf16, #tpu.memory_space<vmem>>, vector<128x128xbf16>
    %c0_3 = arith.constant 0 : index
    %c0_4 = arith.constant 0 : index
    %2 = vector.load %arg3[%c0_3, %c0_4] : memref<1x128xf32, #tpu.memory_space<vmem>>, vector<1x128xf32>
    %cst = arith.constant dense<0.000000e+00> : vector<16x128xf32>
    %3 = tpu.matmul %0, %1, %cst {dimension_numbers = #tpu.dot_dimension_numbers<[1], [0], [0], [1], [0, 0, 1, 1], [], []>} : vector<16x128xbf16>, vector<128x128xbf16>, vector<16x128xf32> -> vector<16x128xf32>
    %4 = vector.broadcast %2 : vector<1x128xf32> to vector<16x128xf32>
    %5 = arith.addf %3, %4 : vector<16x128xf32>
    %cst_5 = arith.constant 5.000000e-01 : f32
    %6 = vector.broadcast %cst_5 : f32 to vector<16x128xf32>
    %7 = arith.mulf %6, %5 : vector<16x128xf32>
    %8 = math.tanh %7 : vector<16x128xf32>
    %cst_6 = arith.constant 1.000000e+00 : f32
    %9 = vector.broadcast %cst_6 : f32 to vector<16x128xf32>
    %10 = arith.addf %8, %9 : vector<16x128xf32>
    %cst_7 = arith.constant 5.000000e-01 : f32
    %11 = vector.broadcast %cst_7 : f32 to vector<16x128xf32>
    %12 = arith.mulf %11, %10 : vector<16x128xf32>
    %13 = arith.truncf %12 : vector<16x128xf32> to vector<16x128xbf16>
    %c0_8 = arith.constant 0 : index
    %c0_9 = arith.constant 0 : index
    %14 = vector.load %arg4[%c0_8, %c0_9] : memref<128x128xbf16, #tpu.memory_space<vmem>>, vector<128x128xbf16>
    %c0_10 = arith.constant 0 : index
    %c0_11 = arith.constant 0 : index
    %15 = vector.load %arg5[%c0_10, %c0_11] : memref<1x128xf32, #tpu.memory_space<vmem>>, vector<1x128xf32>
    %cst_12 = arith.constant dense<0.000000e+00> : vector<16x128xf32>
    %16 = tpu.matmul %13, %14, %cst_12 {dimension_numbers = #tpu.dot_dimension_numbers<[1], [0], [0], [1], [0, 0, 1, 1], [], []>} : vector<16x128xbf16>, vector<128x128xbf16>, vector<16x128xf32> -> vector<16x128xf32>
    %17 = vector.broadcast %15 : vector<1x128xf32> to vector<16x128xf32>
    %18 = arith.addf %16, %17 : vector<16x128xf32>
    %cst_13 = arith.constant 5.000000e-01 : f32
    %19 = vector.broadcast %cst_13 : f32 to vector<16x128xf32>
    %20 = arith.mulf %19, %18 : vector<16x128xf32>
    %21 = math.tanh %20 : vector<16x128xf32>
    %cst_14 = arith.constant 1.000000e+00 : f32
    %22 = vector.broadcast %cst_14 : f32 to vector<16x128xf32>
    %23 = arith.addf %21, %22 : vector<16x128xf32>
    %cst_15 = arith.constant 5.000000e-01 : f32
    %24 = vector.broadcast %cst_15 : f32 to vector<16x128xf32>
    %25 = arith.mulf %24, %23 : vector<16x128xf32>
    %26 = arith.truncf %25 : vector<16x128xf32> to vector<16x128xbf16>
    %c0_16 = arith.constant 0 : index
    %c0_17 = arith.constant 0 : index
    %27 = vector.load %arg6[%c0_16, %c0_17] : memref<128x128xbf16, #tpu.memory_space<vmem>>, vector<128x128xbf16>
    %c0_18 = arith.constant 0 : index
    %c0_19 = arith.constant 0 : index
    %28 = vector.load %arg7[%c0_18, %c0_19] : memref<1x128xf32, #tpu.memory_space<vmem>>, vector<1x128xf32>
    %cst_20 = arith.constant dense<0.000000e+00> : vector<16x128xf32>
    %29 = tpu.matmul %26, %27, %cst_20 {dimension_numbers = #tpu.dot_dimension_numbers<[1], [0], [0], [1], [0, 0, 1, 1], [], []>} : vector<16x128xbf16>, vector<128x128xbf16>, vector<16x128xf32> -> vector<16x128xf32>
    %30 = vector.broadcast %28 : vector<1x128xf32> to vector<16x128xf32>
    %31 = arith.addf %29, %30 : vector<16x128xf32>
    %cst_21 = arith.constant 5.000000e-01 : f32
    %32 = vector.broadcast %cst_21 : f32 to vector<16x128xf32>
    %33 = arith.mulf %32, %31 : vector<16x128xf32>
    %34 = math.tanh %33 : vector<16x128xf32>
    %cst_22 = arith.constant 1.000000e+00 : f32
    %35 = vector.broadcast %cst_22 : f32 to vector<16x128xf32>
    %36 = arith.addf %34, %35 : vector<16x128xf32>
    %cst_23 = arith.constant 5.000000e-01 : f32
    %37 = vector.broadcast %cst_23 : f32 to vector<16x128xf32>
    %38 = arith.mulf %37, %36 : vector<16x128xf32>
    %39 = arith.truncf %38 : vector<16x128xf32> to vector<16x128xbf16>
    %c0_24 = arith.constant 0 : index
    %c0_25 = arith.constant 0 : index
    %40 = vector.load %arg8[%c0_24, %c0_25] : memref<128x128xbf16, #tpu.memory_space<vmem>>, vector<128x128xbf16>
    %c0_26 = arith.constant 0 : index
    %c0_27 = arith.constant 0 : index
    %41 = vector.load %arg9[%c0_26, %c0_27] : memref<1x128xf32, #tpu.memory_space<vmem>>, vector<1x128xf32>
    %cst_28 = arith.constant dense<0.000000e+00> : vector<16x128xf32>
    %42 = tpu.matmul %39, %40, %cst_28 {dimension_numbers = #tpu.dot_dimension_numbers<[1], [0], [0], [1], [0, 0, 1, 1], [], []>} : vector<16x128xbf16>, vector<128x128xbf16>, vector<16x128xf32> -> vector<16x128xf32>
    %43 = vector.broadcast %41 : vector<1x128xf32> to vector<16x128xf32>
    %44 = arith.addf %42, %43 : vector<16x128xf32>
    %c0_29 = arith.constant 0 : index
    %c0_30 = arith.constant 0 : index
    %45 = vector.load %arg10[%c0_29, %c0_30] : memref<16x128xf32, #tpu.memory_space<vmem>>, vector<16x128xf32>
    tpu.vector_store %arg10[%c0_29, %c0_30], %44 {strides = array<i32>} : memref<16x128xf32, #tpu.memory_space<vmem>>, vector<16x128xf32>,
    return
  }
  func.func @transform_0(%arg0: i32) -> (i32, i32) {
    %c0_i32 = arith.constant 0 : i32
    %c0_i32_0 = arith.constant 0 : i32
    return %arg0, %c0_i32 : i32, i32
  }
  func.func @transform_1(%arg0: i32) -> (i32, i32) {
    %c0_i32 = arith.constant 0 : i32
    %c0_i32_0 = arith.constant 0 : i32
    %c0_i32_1 = arith.constant 0 : i32
    return %c0_i32, %c0_i32_0 : i32, i32
  }
  func.func @transform_2(%arg0: i32) -> (i32, i32) {
    %c0_i32 = arith.constant 0 : i32
    %c0_i32_0 = arith.constant 0 : i32
    %c0_i32_1 = arith.constant 0 : i32
    return %c0_i32, %c0_i32_0 : i32, i32
  }
  func.func @transform_3(%arg0: i32) -> (i32, i32) {
    %c0_i32 = arith.constant 0 : i32
    %c0_i32_0 = arith.constant 0 : i32
    %c0_i32_1 = arith.constant 0 : i32
    return %c0_i32, %c0_i32_0 : i32, i32
  }
  func.func @transform_4(%arg0: i32) -> (i32, i32) {
    %c0_i32 = arith.constant 0 : i32
    %c0_i32_0 = arith.constant 0 : i32
    %c0_i32_1 = arith.constant 0 : i32
    return %c0_i32, %c0_i32_0 : i32, i32
  }
  func.func @transform_5(%arg0: i32) -> (i32, i32) {
    %c0_i32 = arith.constant 0 : i32
    %c0_i32_0 = arith.constant 0 : i32
    %c0_i32_1 = arith.constant 0 : i32
    return %c0_i32, %c0_i32_0 : i32, i32
  }
  func.func @transform_6(%arg0: i32) -> (i32, i32) {
    %c0_i32 = arith.constant 0 : i32
    %c0_i32_0 = arith.constant 0 : i32
    %c0_i32_1 = arith.constant 0 : i32
    return %c0_i32, %c0_i32_0 : i32, i32
  }
  func.func @transform_7(%arg0: i32) -> (i32, i32) {
    %c0_i32 = arith.constant 0 : i32
    %c0_i32_0 = arith.constant 0 : i32
    %c0_i32_1 = arith.constant 0 : i32
    return %c0_i32, %c0_i32_0 : i32, i32
  }
  func.func @transform_8(%arg0: i32) -> (i32, i32) {
    %c0_i32 = arith.constant 0 : i32
    %c0_i32_0 = arith.constant 0 : i32
    %c0_i32_1 = arith.constant 0 : i32
    return %c0_i32, %c0_i32_0 : i32, i32
  }
  func.func @transform_9(%arg0: i32) -> (i32, i32) {
    %c0_i32 = arith.constant 0 : i32
    %c0_i32_0 = arith.constant 0 : i32
    return %arg0, %c0_i32 : i32, i32
  }
}

module attributes {stable_mosaic.version = 11 : i64} {
  func.func @_mlp_kernel(%arg0: i32, %arg1: memref<16x128xbf16, #tpu.memory_space<vmem>>, %arg2: memref<128x128xbf16, #tpu.memory_space<vmem>>, %arg3: memref<1x128xf32, #tpu.memory_space<vmem>>, %arg4: memref<128x128xbf16, #tpu.memory_space<vmem>>, %arg5: memref<1x128xf32, #tpu.memory_space<vmem>>, %arg6: memref<128x128xbf16, #tpu.memory_space<vmem>>, %arg7: memref<1x128xf32, #tpu.memory_space<vmem>>, %arg8: memref<128x128xbf16, #tpu.memory_space<vmem>>, %arg9: memref<1x128xf32, #tpu.memory_space<vmem>>, %arg10: memref<16x128xf32, #tpu.memory_space<vmem>>) attributes {dimension_semantics = [#tpu.dimension_semantics<parallel>], iteration_bounds = array<i64: 1>, scalar_prefetch = 0 : i64, scratch_operands = 0 : i64, tpu.core_type = #tpu.core_type<tc>, window_params = [{transform_indices = @transform_0, window_bounds = array<i64: 16, 128>}, {pipeline_mode = #tpu.pipeline_mode<synchronous>, transform_indices = @transform_1, window_bounds = array<i64: 128, 128>}, {pipeline_mode = #tpu.pipeline_mode<synchronous>, transform_indices = @transform_2, window_bounds = array<i64: 1, 128>}, {pipeline_mode = #tpu.pipeline_mode<synchronous>, transform_indices = @transform_3, window_bounds = array<i64: 128, 128>}, {pipeline_mode = #tpu.pipeline_mode<synchronous>, transform_indices = @transform_4, window_bounds = array<i64: 1, 128>}, {pipeline_mode = #tpu.pipeline_mode<synchronous>, transform_indices = @transform_5, window_bounds = array<i64: 128, 128>}, {pipeline_mode = #tpu.pipeline_mode<synchronous>, transform_indices = @transform_6, window_bounds = array<i64: 1, 128>}, {pipeline_mode = #tpu.pipeline_mode<synchronous>, transform_indices = @transform_7, window_bounds = array<i64: 128, 128>}, {pipeline_mode = #tpu.pipeline_mode<synchronous>, transform_indices = @transform_8, window_bounds = array<i64: 1, 128>}, {transform_indices = @transform_9, window_bounds = array<i64: 16, 128>}]} {
    %c0 = arith.constant 0 : index
    %c0_0 = arith.constant 0 : index
    %0 = vector.load %arg1[%c0, %c0_0] : memref<16x128xbf16, #tpu.memory_space<vmem>>, vector<16x128xbf16>
    %c0_1 = arith.constant 0 : index
    %c0_2 = arith.constant 0 : index
    %1 = vector.load %arg2[%c0_1, %c0_2] : memref<128x128xbf16, #tpu.memory_space<vmem>>, vector<128x128xbf16>
    %c0_3 = arith.constant 0 : index
    %c0_4 = arith.constant 0 : index
    %2 = vector.load %arg3[%c0_3, %c0_4] : memref<1x128xf32, #tpu.memory_space<vmem>>, vector<1x128xf32>
    %cst = arith.constant dense<0.000000e+00> : vector<16x128xf32>
    %3 = tpu.matmul %0, %1, %cst {dimension_numbers = #tpu.dot_dimension_numbers<[1], [0], [0], [1], [0, 0, 1, 1], [], []>} : vector<16x128xbf16>, vector<128x128xbf16>, vector<16x128xf32> -> vector<16x128xf32>
    %4 = vector.broadcast %2 : vector<1x128xf32> to vector<16x128xf32>
    %5 = arith.addf %3, %4 : vector<16x128xf32>
    %cst_5 = arith.constant 5.000000e-01 : f32
    %6 = vector.broadcast %cst_5 : f32 to vector<16x128xf32>
    %7 = arith.mulf %6, %5 : vector<16x128xf32>
    %8 = math.tanh %7 : vector<16x128xf32>
    %cst_6 = arith.constant 1.000000e+00 : f32
    %9 = vector.broadcast %cst_6 : f32 to vector<16x128xf32>
    %10 = arith.addf %8, %9 : vector<16x128xf32>
    %cst_7 = arith.constant 5.000000e-01 : f32
    %11 = vector.broadcast %cst_7 : f32 to vector<16x128xf32>
    %12 = arith.mulf %11, %10 : vector<16x128xf32>
    %13 = arith.truncf %12 : vector<16x128xf32> to vector<16x128xbf16>
    %c0_8 = arith.constant 0 : index
    %c0_9 = arith.constant 0 : index
    %14 = vector.load %arg4[%c0_8, %c0_9] : memref<128x128xbf16, #tpu.memory_space<vmem>>, vector<128x128xbf16>
    %c0_10 = arith.constant 0 : index
    %c0_11 = arith.constant 0 : index
    %15 = vector.load %arg5[%c0_10, %c0_11] : memref<1x128xf32, #tpu.memory_space<vmem>>, vector<1x128xf32>
    %cst_12 = arith.constant dense<0.000000e+00> : vector<16x128xf32>
    %16 = tpu.matmul %13, %14, %cst_12 {dimension_numbers = #tpu.dot_dimension_numbers<[1], [0], [0], [1], [0, 0, 1, 1], [], []>} : vector<16x128xbf16>, vector<128x128xbf16>, vector<16x128xf32> -> vector<16x128xf32>
    %17 = vector.broadcast %15 : vector<1x128xf32> to vector<16x128xf32>
    %18 = arith.addf %16, %17 : vector<16x128xf32>
    %cst_13 = arith.constant 5.000000e-01 : f32
    %19 = vector.broadcast %cst_13 : f32 to vector<16x128xf32>
    %20 = arith.mulf %19, %18 : vector<16x128xf32>
    %21 = math.tanh %20 : vector<16x128xf32>
    %cst_14 = arith.constant 1.000000e+00 : f32
    %22 = vector.broadcast %cst_14 : f32 to vector<16x128xf32>
    %23 = arith.addf %21, %22 : vector<16x128xf32>
    %cst_15 = arith.constant 5.000000e-01 : f32
    %24 = vector.broadcast %cst_15 : f32 to vector<16x128xf32>
    %25 = arith.mulf %24, %23 : vector<16x128xf32>
    %26 = arith.truncf %25 : vector<16x128xf32> to vector<16x128xbf16>
    %c0_16 = arith.constant 0 : index
    %c0_17 = arith.constant 0 : index
    %27 = vector.load %arg6[%c0_16, %c0_17] : memref<128x128xbf16, #tpu.memory_space<vmem>>, vector<128x128xbf16>
    %c0_18 = arith.constant 0 : index
    %c0_19 = arith.constant 0 : index
    %28 = vector.load %arg7[%c0_18, %c0_19] : memref<1x128xf32, #tpu.memory_space<vmem>>, vector<1x128xf32>
    %cst_20 = arith.constant dense<0.000000e+00> : vector<16x128xf32>
    %29 = tpu.matmul %26, %27, %cst_20 {dimension_numbers = #tpu.dot_dimension_numbers<[1], [0], [0], [1], [0, 0, 1, 1], [], []>} : vector<16x128xbf16>, vector<128x128xbf16>, vector<16x128xf32> -> vector<16x128xf32>
    %30 = vector.broadcast %28 : vector<1x128xf32> to vector<16x128xf32>
    %31 = arith.addf %29, %30 : vector<16x128xf32>
    %cst_21 = arith.constant 5.000000e-01 : f32
    %32 = vector.broadcast %cst_21 : f32 to vector<16x128xf32>
    %33 = arith.mulf %32, %31 : vector<16x128xf32>
    %34 = math.tanh %33 : vector<16x128xf32>
    %cst_22 = arith.constant 1.000000e+00 : f32
    %35 = vector.broadcast %cst_22 : f32 to vector<16x128xf32>
    %36 = arith.addf %34, %35 : vector<16x128xf32>
    %cst_23 = arith.constant 5.000000e-01 : f32
    %37 = vector.broadcast %cst_23 : f32 to vector<16x128xf32>
    %38 = arith.mulf %37, %36 : vector<16x128xf32>
    %39 = arith.truncf %38 : vector<16x128xf32> to vector<16x128xbf16>
    %c0_24 = arith.constant 0 : index
    %c0_25 = arith.constant 0 : index
    %40 = vector.load %arg8[%c0_24, %c0_25] : memref<128x128xbf16, #tpu.memory_space<vmem>>, vector<128x128xbf16>
    %c0_26 = arith.constant 0 : index
    %c0_27 = arith.constant 0 : index
    %41 = vector.load %arg9[%c0_26, %c0_27] : memref<1x128xf32, #tpu.memory_space<vmem>>, vector<1x128xf32>
    %cst_28 = arith.constant dense<0.000000e+00> : vector<16x128xf32>
    %42 = tpu.matmul %39, %40, %cst_28 {dimension_numbers = #tpu.dot_dimension_numbers<[1], [0], [0], [1], [0, 0, 1, 1], [], []>} : vector<16x128xbf16>, vector<128x128xbf16>, vector<16x128xf32> -> vector<16x128xf32>
    %43 = vector.broadcast %41 : vector<1x128xf32> to vector<16x128xf32>
    %44 = arith.addf %42, %43 : vector<16x128xf32>
    %c0_29 = arith.constant 0 : index
    %c0_30 = arith.constant 0 : index
    %45 = vector.load %arg10[%c0_29, %c0_30] : memref<16x128xf32, #tpu.memory_space<vmem>>, vector<16x128xf32>
    tpu.vector_store %arg10[%c0_29, %c0_30], %44 {strides = array<i32>} : memref<16x128xf32, #tpu.memory_space<vmem>>, vector<16x128xf32>,
    return
  }
  func.func @transform_0(%arg0: i32) -> (i32, i32) {
    %c0_i32 = arith.constant 0 : i32
    %c0_i32_0 = arith.constant 0 : i32
    return %arg0, %c0_i32 : i32, i32
  }
  func.func @transform_1(%arg0: i32) -> (i32, i32) {
    %c0_i32 = arith.constant 0 : i32
    %c0_i32_0 = arith.constant 0 : i32
    %c0_i32_1 = arith.constant 0 : i32
    return %c0_i32, %c0_i32_0 : i32, i32
  }
  func.func @transform_2(%arg0: i32) -> (i32, i32) {
    %c0_i32 = arith.constant 0 : i32
    %c0_i32_0 = arith.constant 0 : i32
    %c0_i32_1 = arith.constant 0 : i32
    return %c0_i32, %c0_i32_0 : i32, i32
  }
  func.func @transform_3(%arg0: i32) -> (i32, i32) {
    %c0_i32 = arith.constant 0 : i32
    %c0_i32_0 = arith.constant 0 : i32
    %c0_i32_1 = arith.constant 0 : i32
    return %c0_i32, %c0_i32_0 : i32, i32
  }
  func.func @transform_4(%arg0: i32) -> (i32, i32) {
    %c0_i32 = arith.constant 0 : i32
    %c0_i32_0 = arith.constant 0 : i32
    %c0_i32_1 = arith.constant 0 : i32
    return %c0_i32, %c0_i32_0 : i32, i32
  }
  func.func @transform_5(%arg0: i32) -> (i32, i32) {
    %c0_i32 = arith.constant 0 : i32
    %c0_i32_0 = arith.constant 0 : i32
    %c0_i32_1 = arith.constant 0 : i32
    return %c0_i32, %c0_i32_0 : i32, i32
  }
  func.func @transform_6(%arg0: i32) -> (i32, i32) {
    %c0_i32 = arith.constant 0 : i32
    %c0_i32_0 = arith.constant 0 : i32
    %c0_i32_1 = arith.constant 0 : i32
    return %c0_i32, %c0_i32_0 : i32, i32
  }
  func.func @transform_7(%arg0: i32) -> (i32, i32) {
    %c0_i32 = arith.constant 0 : i32
    %c0_i32_0 = arith.constant 0 : i32
    %c0_i32_1 = arith.constant 0 : i32
    return %c0_i32, %c0_i32_0 : i32, i32
  }
  func.func @transform_8(%arg0: i32) -> (i32, i32) {
    %c0_i32 = arith.constant 0 : i32
    %c0_i32_0 = arith.constant 0 : i32
    %c0_i32_1 = arith.constant 0 : i32
    return %c0_i32, %c0_i32_0 : i32, i32
  }
  func.func @transform_9(%arg0: i32) -> (i32, i32) {
    %c0_i32 = arith.constant 0 : i32
    %c0_i32_0 = arith.constant 0 : i32
    return %arg0, %c0_i32 : i32, i32
  }
}

</mosaic_0001>

<llo_original>
// kernel: tpu_custom_call.1
$region0: #{tpu_custom_call.1}
  #allocation0 [shape = 'u32[]', space=smem, size = 0x4, offset = 0x4, fixed_abs, tag = 'smem constant byte address 0x4 - core index']
  #allocation1 [shape = 'u32[144,128]{1,0:T(1,128)}', space=vmem, size = 0x12000, scoped, tag = 'internal scratch']
  %s0 = inlined_call_operand.hbm [shape: bf16[16,128], index: 0, kind: input, shape index: {}]
  %s1 = inlined_call_operand.hbm [shape: bf16[128,128], index: 1, kind: input, shape index: {}]
  %s2 = inlined_call_operand.vmem [shape: f32[1,128], index: 2, kind: input, shape index: {}]
  %s3 = inlined_call_operand.hbm [shape: bf16[128,128], index: 3, kind: input, shape index: {}]
  %s4 = inlined_call_operand.vmem [shape: f32[1,128], index: 4, kind: input, shape index: {}]
  %s5 = inlined_call_operand.hbm [shape: bf16[128,128], index: 5, kind: input, shape index: {}]
  %s6 = inlined_call_operand.vmem [shape: f32[1,128], index: 6, kind: input, shape index: {}]
  %s7 = inlined_call_operand.hbm [shape: bf16[128,128], index: 7, kind: input, shape index: {}]
  %s8 = inlined_call_operand.vmem [shape: f32[1,128], index: 8, kind: input, shape index: {}]
  %s9 = inlined_call_operand.hbm [shape: f32[16,128], index: 9, kind: output, shape index: {}]
  %s10 = sld [smem:[#allocation0]]
  $region66: #{tpu_custom_call.1} parent=0
    _
  %s12 = ssub.s32 1, %s10
  %s13 = scalar_select 0, %s12, %s10
  $region1: #{tpu_custom_call.1} parent=0
    #allocation2 [shape = 'u8[4096]{0}', space=vmem, size = 0x1000, scoped, tag = 'input window, operand 0, single buffered']
    #allocation3 [shape = 's32[1]{0}', space=sflag, size = 0x4, scoped, tag = 'scoped memory for tpu_custom_call.1']
    #allocation4 [shape = 's32[1]{0}', space=sflag, size = 0x4, scoped, tag = 'scoped memory for tpu_custom_call.1']
    #allocation5 [shape = 'u8[32768]{0}', space=vmem, size = 0x8000, scoped, tag = 'input window, operand 1, single buffered']
    #allocation6 [shape = 's32[1]{0}', space=sflag, size = 0x4, scoped, tag = 'scoped memory for tpu_custom_call.1']
    #allocation7 [shape = 'u8[32768]{0}', space=vmem, size = 0x8000, scoped, tag = 'input window, operand 3, single buffered']
    #allocation8 [shape = 'u8[32768]{0}', space=vmem, size = 0x8000, scoped, tag = 'input window, operand 5, single buffered']
    #allocation9 [shape = 's32[1]{0}', space=sflag, size = 0x4, scoped, tag = 'scoped memory for tpu_custom_call.1']
    #allocation10 [shape = 'u8[32768]{0}', space=vmem, size = 0x8000, scoped, tag = 'input window, operand 7, single buffered']
    #allocation11 [shape = 'u8[8192]{0}', space=vmem, size = 0x2000, scoped, tag = 'output window, operand 0, single buffered']
    %14 = vsyncpa [#allocation3], 0
    %15 = vsyncpa [#allocation6], 0
    %16 = vsyncpa [#allocation9], 0
    %17 = vsyncpa [#allocation4], 0
    // Predicated region
    $region2: #{tpu_custom_call.1} parent=1 // pred_check
      _
    $region3: #{tpu_custom_call.1} parent=1 // pred_check_branch
      %19 = sbr.rel (0) target = $region5
    $region4: #{tpu_custom_call.1} parent=1 // pred_region
      %s21 = ssub.s32 128, 128
      %22 = vsyncadd [#allocation3], %s21
      %s23 = sshll.u32 [#allocation2], 4
      %s24 = int_to_ptr.vmem [resolvable:$true] %s23
      %29 = dma.hbm_to_vmem [thread:$0]  %s0, 128, %s24, [#allocation3], 64, 64, 4
    $region5: #{tpu_custom_call.1} parent=1 // pred_fallthru
      _
    // Predicated region
    $region6: #{tpu_custom_call.1} parent=1 // pred_check
      _
    $region7: #{tpu_custom_call.1} parent=1 // pred_check_branch
      %31 = sbr.rel (0) target = $region9
    $region8: #{tpu_custom_call.1} parent=1 // pred_region
      %s33 = ssub.s32 1024, 1024
      %34 = vsyncadd [#allocation6], %s33
      %s35 = sshll.u32 [#allocation5], 4
      %s36 = int_to_ptr.vmem [resolvable:$true] %s35
      %41 = dma.hbm_to_vmem [thread:$0]  %s1, 1024, %s36, [#allocation6], 64, 64, 4
    $region9: #{tpu_custom_call.1} parent=1 // pred_fallthru
      _
    // Predicated region
    $region10: #{tpu_custom_call.1} parent=1 // pred_check
      _
    $region11: #{tpu_custom_call.1} parent=1 // pred_check_branch
      %43 = sbr.rel (0) target = $region13
    $region12: #{tpu_custom_call.1} parent=1 // pred_region
      _
    $region13: #{tpu_custom_call.1} parent=1 // pred_fallthru
      _
    // Predicated region
    $region14: #{tpu_custom_call.1} parent=1 // pred_check
      _
    $region15: #{tpu_custom_call.1} parent=1 // pred_check_branch
      %45 = sbr.rel (0) target = $region17
    $region16: #{tpu_custom_call.1} parent=1 // pred_region
      %s47 = ssub.s32 1024, 1024
      %48 = vsyncadd [#allocation6], %s47
      %s49 = sshll.u32 [#allocation7], 4
      %s50 = int_to_ptr.vmem [resolvable:$true] %s49
      %55 = dma.hbm_to_vmem [thread:$0]  %s3, 1024, %s50, [#allocation6], 64, 64, 4
    $region17: #{tpu_custom_call.1} parent=1 // pred_fallthru
      _
    // Predicated region
    $region18: #{tpu_custom_call.1} parent=1 // pred_check
      _
    $region19: #{tpu_custom_call.1} parent=1 // pred_check_branch
      %57 = sbr.rel (0) target = $region21
    $region20: #{tpu_custom_call.1} parent=1 // pred_region
      _
    $region21: #{tpu_custom_call.1} parent=1 // pred_fallthru
      _
    // Predicated region
    $region22: #{tpu_custom_call.1} parent=1 // pred_check
      _
    $region23: #{tpu_custom_call.1} parent=1 // pred_check_branch
      %59 = sbr.rel (0) target = $region25
    $region24: #{tpu_custom_call.1} parent=1 // pred_region
      %s61 = ssub.s32 1024, 1024
      %62 = vsyncadd [#allocation9], %s61
      %s63 = sshll.u32 [#allocation8], 4
      %s64 = int_to_ptr.vmem [resolvable:$true] %s63
      %69 = dma.hbm_to_vmem [thread:$0]  %s5, 1024, %s64, [#allocation9], 64, 64, 4
    $region25: #{tpu_custom_call.1} parent=1 // pred_fallthru
      _
    // Predicated region
    $region26: #{tpu_custom_call.1} parent=1 // pred_check
      _
    $region27: #{tpu_custom_call.1} parent=1 // pred_check_branch
      %71 = sbr.rel (0) target = $region29
    $region28: #{tpu_custom_call.1} parent=1 // pred_region
      _
    $region29: #{tpu_custom_call.1} parent=1 // pred_fallthru
      _
    // Predicated region
    $region30: #{tpu_custom_call.1} parent=1 // pred_check
      _
    $region31: #{tpu_custom_call.1} parent=1 // pred_check_branch
      %73 = sbr.rel (0) target = $region33
    $region32: #{tpu_custom_call.1} parent=1 // pred_region
      %s75 = ssub.s32 1024, 1024
      %76 = vsyncadd [#allocation9], %s75
      %s77 = sshll.u32 [#allocation10], 4
      %s78 = int_to_ptr.vmem [resolvable:$true] %s77
      %83 = dma.hbm_to_vmem [thread:$0]  %s7, 1024, %s78, [#allocation9], 64, 64, 4
    $region33: #{tpu_custom_call.1} parent=1 // pred_fallthru
      _
    // Predicated region
    $region34: #{tpu_custom_call.1} parent=1 // pred_check
      _
    $region35: #{tpu_custom_call.1} parent=1 // pred_check_branch
      %85 = sbr.rel (0) target = $region37
    $region36: #{tpu_custom_call.1} parent=1 // pred_region
      _
    $region37: #{tpu_custom_call.1} parent=1 // pred_fallthru
      _
    // Predicated region
    $region38: #{tpu_custom_call.1} parent=1 // pred_check
      _
    $region39: #{tpu_custom_call.1} parent=1 // pred_check_branch
      %87 = sbr.rel (0) target = $region41
    $region40: #{tpu_custom_call.1} parent=1 // pred_region
      %88 = dma.done [#allocation3], 128
    $region41: #{tpu_custom_call.1} parent=1 // pred_fallthru
      _
    // Predicated region
    $region42: #{tpu_custom_call.1} parent=1 // pred_check
      _
    $region43: #{tpu_custom_call.1} parent=1 // pred_check_branch
      %90 = sbr.rel (0) target = $region45
    $region44: #{tpu_custom_call.1} parent=1 // pred_region
      %91 = dma.done [#allocation6], 1024
    $region45: #{tpu_custom_call.1} parent=1 // pred_fallthru
      _
    // Predicated region
    $region46: #{tpu_custom_call.1} parent=1 // pred_check
      _
    $region47: #{tpu_custom_call.1} parent=1 // pred_check_branch
      %93 = sbr.rel (0) target = $region49
    $region48: #{tpu_custom_call.1} parent=1 // pred_region
      %94 = dma.done [#allocation6], 1024
    $region49: #{tpu_custom_call.1} parent=1 // pred_fallthru
      _
    // Predicated region
    $region50: #{tpu_custom_call.1} parent=1 // pred_check
      _
    $region51: #{tpu_custom_call.1} parent=1 // pred_check_branch
      %96 = sbr.rel (0) target = $region53
    $region52: #{tpu_custom_call.1} parent=1 // pred_region
      %97 = dma.done [#allocation9], 1024
    $region53: #{tpu_custom_call.1} parent=1 // pred_fallthru
      _
    // Predicated region
    $region54: #{tpu_custom_call.1} parent=1 // pred_check
      _
    $region55: #{tpu_custom_call.1} parent=1 // pred_check_branch
      %99 = sbr.rel (0) target = $region57
    $region56: #{tpu_custom_call.1} parent=1 // pred_region
      %100 = dma.done [#allocation9], 1024
    $region57: #{tpu_custom_call.1} parent=1 // pred_fallthru
      _
    %v102 = vld [vmem:[#allocation2] sm:$0xf]
    %v103 = vld [vmem:[#allocation2 + $0x4] sm:$0xf]
    %v104 = vld [vmem:[#allocation5] sm:$0xf]
    %v105 = vld [vmem:[#allocation5 + $0x4] sm:$0xf]
    %v106 = vld [vmem:[#allocation5 + $0x8] sm:$0xf]
    %v107 = vld [vmem:[#allocation5 + $0xc] sm:$0xf]
    %v108 = vld [vmem:[#allocation5 + $0x10] sm:$0xf]
    %v109 = vld [vmem:[#allocation5 + $0x14] sm:$0xf]
    %v110 = vld [vmem:[#allocation5 + $0x18] sm:$0xf]
    %v111 = vld [vmem:[#allocation5 + $0x1c] sm:$0xf]
    %v112 = vld [vmem:[#allocation5 + $0x20] sm:$0xf]
    %v113 = vld [vmem:[#allocation5 + $0x24] sm:$0xf]
    %v114 = vld [vmem:[#allocation5 + $0x28] sm:$0xf]
    %v115 = vld [vmem:[#allocation5 + $0x2c] sm:$0xf]
    %v116 = vld [vmem:[#allocation5 + $0x30] sm:$0xf]
    %v117 = vld [vmem:[#allocation5 + $0x34] sm:$0xf]
    %v118 = vld [vmem:[#allocation5 + $0x38] sm:$0xf]
    %v119 = vld [vmem:[#allocation5 + $0x3c] sm:$0xf]
    %v120 = vld [vmem:[%s2] sm:$0x1]
    %v122 = vlaneseq
    %v123 = vshrl.u32 %v122, 7
    %v124 = vsub.s32 0, %v123
    %v125 = vrot.slane %v120, %v124
    %v129 = vunpack.c.l.b16 %v102
    %v130 = vunpack.c.l.b16 %v103
    %v131 = vpack.c.b16 %v130, %v129
    %v149 = vunpack.c.l.b16 %v104
    %v150 = vunpack.c.l.b16 %v105
    %v151 = vunpack.c.l.b16 %v106
    %v152 = vunpack.c.l.b16 %v107
    %v153 = vunpack.c.l.b16 %v108
    %v154 = vunpack.c.l.b16 %v109
    %v155 = vunpack.c.l.b16 %v110
    %v156 = vunpack.c.l.b16 %v111
    %v157 = vunpack.c.l.b16 %v112
    %v158 = vunpack.c.l.b16 %v113
    %v159 = vunpack.c.l.b16 %v114
    %v160 = vunpack.c.l.b16 %v115
    %v161 = vunpack.c.l.b16 %v116
    %v162 = vunpack.c.l.b16 %v117
    %v163 = vunpack.c.l.b16 %v118
    %v164 = vunpack.c.l.b16 %v119
    %v165 = vpack.c.b16 %v150, %v149
    %v166 = vpack.c.b16 %v152, %v151
    %v167 = vpack.c.b16 %v154, %v153
    %v168 = vpack.c.b16 %v156, %v155
    %v169 = vpack.c.b16 %v158, %v157
    %v170 = vpack.c.b16 %v160, %v159
    %v171 = vpack.c.b16 %v162, %v161
    %v172 = vpack.c.b16 %v164, %v163
    %181 = vmatprep.subr.bf16.mxu0 0
    %182 = vmatpush1.bf16.msra.mxu0 %v172
    %183 = vmatprep.subr.bf16.mxu0 0
    %184 = vmatpush1.bf16.msra.mxu0 %v171
    %185 = vmatprep.subr.bf16.mxu0 0
    %186 = vmatpush1.bf16.msra.mxu0 %v170
    %187 = vmatprep.subr.bf16.mxu0 0
    %188 = vmatpush1.bf16.msra.mxu0 %v169
    %189 = vmatprep.subr.bf16.mxu0 0
    %190 = vmatpush1.bf16.msra.mxu0 %v168
    %191 = vmatprep.subr.bf16.mxu0 0
    %192 = vmatpush1.bf16.msra.mxu0 %v167
    %193 = vmatprep.subr.bf16.mxu0 0
    %194 = vmatpush1.bf16.msra.mxu0 %v166
    %195 = vmatprep.subr.bf16.mxu0 0
    %196 = vmatpush1.bf16.msra.mxu0 %v165
    %197 = vmatprep.subr.bf16.mxu0 0
    %198 = vmatpush2.bf16.msra.mxu0 0
    %199 = vmatprep.subr.bf16.mxu0 0
    %200 = vmatpush2.bf16.msra.mxu0 0
    %201 = vmatprep.subr.bf16.mxu0 0
    %202 = vmatpush2.bf16.msra.mxu0 0
    %203 = vmatprep.subr.bf16.mxu0 0
    %204 = vmatpush2.bf16.msra.mxu0 0
    %205 = vmatprep.subr.bf16.mxu0 0
    %206 = vmatpush2.bf16.msra.mxu0 0
    %207 = vmatprep.subr.bf16.mxu0 0
    %208 = vmatpush2.bf16.msra.mxu0 0
    %209 = vmatprep.subr.bf16.mxu0 0
    %210 = vmatpush2.bf16.msra.mxu0 0
    %211 = vmatprep.subr.bf16.mxu0 0
    %212 = vmatpush2.bf16.msra.mxu0 0
    %213 = vmatprep.mubr.bf16.mxu0 0
    %214 = vmatmul.mubr.bf16.gmra.mxu0 %v131
    %v215 = vpop.f32.mrf.mxu0
    %v216 = vadd.f32 %v125, %v215
    %v217 = vpop.f32.mrf.mxu0
    %v218 = vpop.f32.mrf.mxu0
    %v219 = vadd.f32 %v125, %v218
    %v220 = vpop.f32.mrf.mxu0
    %221 = vdwg.mxu0
    %v222 = vmul.f32 %v216, 0.5
    %v223 = vmul.f32 %v219, 0.5
    %v224 = vtanh.pop %v222
    %v225 = vtanh.pop %v223
    %v226 = vadd.f32 %v224, 1.0
    %v227 = vadd.f32 %v225, 1.0
    %v228 = vmul.f32 %v226, 0.5
    %v229 = vmul.f32 %v227, 0.5
    %v230 = vpack.c.bf16 %v229, %v228
    %v231 = vld [vmem:[#allocation7] sm:$0xf]
    %v232 = vld [vmem:[#allocation7 + $0x4] sm:$0xf]
    %v233 = vld [vmem:[#allocation7 + $0x8] sm:$0xf]
    %v234 = vld [vmem:[#allocation7 + $0xc] sm:$0xf]
    %v235 = vld [vmem:[#allocation7 + $0x10] sm:$0xf]
    %v236 = vld [vmem:[#allocation7 + $0x14] sm:$0xf]
    %v237 = vld [vmem:[#allocation7 + $0x18] sm:$0xf]
    %v238 = vld [vmem:[#allocation7 + $0x1c] sm:$0xf]
    %v239 = vld [vmem:[#allocation7 + $0x20] sm:$0xf]
    %v240 = vld [vmem:[#allocation7 + $0x24] sm:$0xf]
    %v241 = vld [vmem:[#allocation7 + $0x28] sm:$0xf]
    %v242 = vld [vmem:[#allocation7 + $0x2c] sm:$0xf]
    %v243 = vld [vmem:[#allocation7 + $0x30] sm:$0xf]
    %v244 = vld [vmem:[#allocation7 + $0x34] sm:$0xf]
    %v245 = vld [vmem:[#allocation7 + $0x38] sm:$0xf]
    %v246 = vld [vmem:[#allocation7 + $0x3c] sm:$0xf]
    %v247 = vld [vmem:[%s4] sm:$0x1]
    %v249 = vlaneseq
    %v250 = vshrl.u32 %v249, 7
    %v251 = vsub.s32 0, %v250
    %v252 = vrot.slane %v247, %v251
    %v270 = vunpack.c.l.b16 %v231
    %v271 = vunpack.c.l.b16 %v232
    %v272 = vunpack.c.l.b16 %v233
    %v273 = vunpack.c.l.b16 %v234
    %v274 = vunpack.c.l.b16 %v235
    %v275 = vunpack.c.l.b16 %v236
    %v276 = vunpack.c.l.b16 %v237
    %v277 = vunpack.c.l.b16 %v238
    %v278 = vunpack.c.l.b16 %v239
    %v279 = vunpack.c.l.b16 %v240
    %v280 = vunpack.c.l.b16 %v241
    %v281 = vunpack.c.l.b16 %v242
    %v282 = vunpack.c.l.b16 %v243
    %v283 = vunpack.c.l.b16 %v244
    %v284 = vunpack.c.l.b16 %v245
    %v285 = vunpack.c.l.b16 %v246
    %v286 = vpack.c.b16 %v271, %v270
    %v287 = vpack.c.b16 %v273, %v272
    %v288 = vpack.c.b16 %v275, %v274
    %v289 = vpack.c.b16 %v277, %v276
    %v290 = vpack.c.b16 %v279, %v278
    %v291 = vpack.c.b16 %v281, %v280
    %v292 = vpack.c.b16 %v283, %v282
    %v293 = vpack.c.b16 %v285, %v284
    %302 = vmatprep.subr.bf16.mxu0 0
    %303 = vmatpush1.bf16.msra.mxu0 %v293
    %304 = vmatprep.subr.bf16.mxu0 0
    %305 = vmatpush1.bf16.msra.mxu0 %v292
    %306 = vmatprep.subr.bf16.mxu0 0
    %307 = vmatpush1.bf16.msra.mxu0 %v291
    %308 = vmatprep.subr.bf16.mxu0 0
    %309 = vmatpush1.bf16.msra.mxu0 %v290
    %310 = vmatprep.subr.bf16.mxu0 0
    %311 = vmatpush1.bf16.msra.mxu0 %v289
    %312 = vmatprep.subr.bf16.mxu0 0
    %313 = vmatpush1.bf16.msra.mxu0 %v288
    %314 = vmatprep.subr.bf16.mxu0 0
    %315 = vmatpush1.bf16.msra.mxu0 %v287
    %316 = vmatprep.subr.bf16.mxu0 0
    %317 = vmatpush1.bf16.msra.mxu0 %v286
    %318 = vmatprep.subr.bf16.mxu0 0
    %319 = vmatpush2.bf16.msra.mxu0 0
    %320 = vmatprep.subr.bf16.mxu0 0
    %321 = vmatpush2.bf16.msra.mxu0 0
    %322 = vmatprep.subr.bf16.mxu0 0
    %323 = vmatpush2.bf16.msra.mxu0 0
    %324 = vmatprep.subr.bf16.mxu0 0
    %325 = vmatpush2.bf16.msra.mxu0 0
    %326 = vmatprep.subr.bf16.mxu0 0
    %327 = vmatpush2.bf16.msra.mxu0 0
    %328 = vmatprep.subr.bf16.mxu0 0
    %329 = vmatpush2.bf16.msra.mxu0 0
    %330 = vmatprep.subr.bf16.mxu0 0
    %331 = vmatpush2.bf16.msra.mxu0 0
    %332 = vmatprep.subr.bf16.mxu0 0
    %333 = vmatpush2.bf16.msra.mxu0 0
    %334 = vmatprep.mubr.bf16.mxu0 0
    %335 = vmatmul.mubr.bf16.gmra.mxu0 %v230
    %v336 = vpop.f32.mrf.mxu0
    %v337 = vadd.f32 %v252, %v336
    %v338 = vpop.f32.mrf.mxu0
    %v339 = vpop.f32.mrf.mxu0
    %v340 = vadd.f32 %v252, %v339
    %v341 = vpop.f32.mrf.mxu0
    %342 = vdwg.mxu0
    %v343 = vmul.f32 %v337, 0.5
    %v344 = vmul.f32 %v340, 0.5
    %v345 = vtanh.pop %v343
    %v346 = vtanh.pop %v344
    %v347 = vadd.f32 %v345, 1.0
    %v348 = vadd.f32 %v346, 1.0
    %v349 = vmul.f32 %v347, 0.5
    %v350 = vmul.f32 %v348, 0.5
    %v351 = vpack.c.bf16 %v350, %v349
    %v352 = vld [vmem:[#allocation8] sm:$0xf]
    %v353 = vld [vmem:[#allocation8 + $0x4] sm:$0xf]
    %v354 = vld [vmem:[#allocation8 + $0x8] sm:$0xf]
    %v355 = vld [vmem:[#allocation8 + $0xc] sm:$0xf]
    %v356 = vld [vmem:[#allocation8 + $0x10] sm:$0xf]
    %v357 = vld [vmem:[#allocation8 + $0x14] sm:$0xf]
    %v358 = vld [vmem:[#allocation8 + $0x18] sm:$0xf]
    %v359 = vld [vmem:[#allocation8 + $0x1c] sm:$0xf]
    %v360 = vld [vmem:[#allocation8 + $0x20] sm:$0xf]
    %v361 = vld [vmem:[#allocation8 + $0x24] sm:$0xf]
    %v362 = vld [vmem:[#allocation8 + $0x28] sm:$0xf]
    %v363 = vld [vmem:[#allocation8 + $0x2c] sm:$0xf]
    %v364 = vld [vmem:[#allocation8 + $0x30] sm:$0xf]
    %v365 = vld [vmem:[#allocation8 + $0x34] sm:$0xf]
    %v366 = vld [vmem:[#allocation8 + $0x38] sm:$0xf]
    %v367 = vld [vmem:[#allocation8 + $0x3c] sm:$0xf]
    %v368 = vld [vmem:[%s6] sm:$0x1]
    %v370 = vlaneseq
    %v371 = vshrl.u32 %v370, 7
    %v372 = vsub.s32 0, %v371
    %v373 = vrot.slane %v368, %v372
    %v391 = vunpack.c.l.b16 %v352
    %v392 = vunpack.c.l.b16 %v353
    %v393 = vunpack.c.l.b16 %v354
    %v394 = vunpack.c.l.b16 %v355
    %v395 = vunpack.c.l.b16 %v356
    %v396 = vunpack.c.l.b16 %v357
    %v397 = vunpack.c.l.b16 %v358
    %v398 = vunpack.c.l.b16 %v359
    %v399 = vunpack.c.l.b16 %v360
    %v400 = vunpack.c.l.b16 %v361
    %v401 = vunpack.c.l.b16 %v362
    %v402 = vunpack.c.l.b16 %v363
    %v403 = vunpack.c.l.b16 %v364
    %v404 = vunpack.c.l.b16 %v365
    %v405 = vunpack.c.l.b16 %v366
    %v406 = vunpack.c.l.b16 %v367
    %v407 = vpack.c.b16 %v392, %v391
    %v408 = vpack.c.b16 %v394, %v393
    %v409 = vpack.c.b16 %v396, %v395
    %v410 = vpack.c.b16 %v398, %v397
    %v411 = vpack.c.b16 %v400, %v399
    %v412 = vpack.c.b16 %v402, %v401
    %v413 = vpack.c.b16 %v404, %v403
    %v414 = vpack.c.b16 %v406, %v405
    %423 = vmatprep.subr.bf16.mxu0 0
    %424 = vmatpush1.bf16.msra.mxu0 %v414
    %425 = vmatprep.subr.bf16.mxu0 0
    %426 = vmatpush1.bf16.msra.mxu0 %v413
    %427 = vmatprep.subr.bf16.mxu0 0
    %428 = vmatpush1.bf16.msra.mxu0 %v412
    %429 = vmatprep.subr.bf16.mxu0 0
    %430 = vmatpush1.bf16.msra.mxu0 %v411
    %431 = vmatprep.subr.bf16.mxu0 0
    %432 = vmatpush1.bf16.msra.mxu0 %v410
    %433 = vmatprep.subr.bf16.mxu0 0
    %434 = vmatpush1.bf16.msra.mxu0 %v409
    %435 = vmatprep.subr.bf16.mxu0 0
    %436 = vmatpush1.bf16.msra.mxu0 %v408
    %437 = vmatprep.subr.bf16.mxu0 0
    %438 = vmatpush1.bf16.msra.mxu0 %v407
    %439 = vmatprep.subr.bf16.mxu0 0
    %440 = vmatpush2.bf16.msra.mxu0 0
    %441 = vmatprep.subr.bf16.mxu0 0
    %442 = vmatpush2.bf16.msra.mxu0 0
    %443 = vmatprep.subr.bf16.mxu0 0
    %444 = vmatpush2.bf16.msra.mxu0 0
    %445 = vmatprep.subr.bf16.mxu0 0
    %446 = vmatpush2.bf16.msra.mxu0 0
    %447 = vmatprep.subr.bf16.mxu0 0
    %448 = vmatpush2.bf16.msra.mxu0 0
    %449 = vmatprep.subr.bf16.mxu0 0
    %450 = vmatpush2.bf16.msra.mxu0 0
    %451 = vmatprep.subr.bf16.mxu0 0
    %452 = vmatpush2.bf16.msra.mxu0 0
    %453 = vmatprep.subr.bf16.mxu0 0
    %454 = vmatpush2.bf16.msra.mxu0 0
    %455 = vmatprep.mubr.bf16.mxu0 0
    %456 = vmatmul.mubr.bf16.gmra.mxu0 %v351
    %v457 = vpop.f32.mrf.mxu0
    %v458 = vadd.f32 %v373, %v457
    %v459 = vpop.f32.mrf.mxu0
    %v460 = vpop.f32.mrf.mxu0
    %v461 = vadd.f32 %v373, %v460
    %v462 = vpop.f32.mrf.mxu0
    %463 = vdwg.mxu0
    %v464 = vmul.f32 %v458, 0.5
    %v465 = vmul.f32 %v461, 0.5
    %v466 = vtanh.pop %v464
    %v467 = vtanh.pop %v465
    %v468 = vadd.f32 %v466, 1.0
    %v469 = vadd.f32 %v467, 1.0
    %v470 = vmul.f32 %v468, 0.5
    %v471 = vmul.f32 %v469, 0.5
    %v472 = vpack.c.bf16 %v471, %v470
    %v473 = vld [vmem:[#allocation10] sm:$0xf]
    %v474 = vld [vmem:[#allocation10 + $0x4] sm:$0xf]
    %v475 = vld [vmem:[#allocation10 + $0x8] sm:$0xf]
    %v476 = vld [vmem:[#allocation10 + $0xc] sm:$0xf]
    %v477 = vld [vmem:[#allocation10 + $0x10] sm:$0xf]
    %v478 = vld [vmem:[#allocation10 + $0x14] sm:$0xf]
    %v479 = vld [vmem:[#allocation10 + $0x18] sm:$0xf]
    %v480 = vld [vmem:[#allocation10 + $0x1c] sm:$0xf]
    %v481 = vld [vmem:[#allocation10 + $0x20] sm:$0xf]
    %v482 = vld [vmem:[#allocation10 + $0x24] sm:$0xf]
    %v483 = vld [vmem:[#allocation10 + $0x28] sm:$0xf]
    %v484 = vld [vmem:[#allocation10 + $0x2c] sm:$0xf]
    %v485 = vld [vmem:[#allocation10 + $0x30] sm:$0xf]
    %v486 = vld [vmem:[#allocation10 + $0x34] sm:$0xf]
    %v487 = vld [vmem:[#allocation10 + $0x38] sm:$0xf]
    %v488 = vld [vmem:[#allocation10 + $0x3c] sm:$0xf]
    %v489 = vld [vmem:[%s8] sm:$0x1]
    %v491 = vlaneseq
    %v492 = vshrl.u32 %v491, 7
    %v493 = vsub.s32 0, %v492
    %v494 = vrot.slane %v489, %v493
    %v512 = vunpack.c.l.b16 %v473
    %v513 = vunpack.c.l.b16 %v474
    %v514 = vunpack.c.l.b16 %v475
    %v515 = vunpack.c.l.b16 %v476
    %v516 = vunpack.c.l.b16 %v477
    %v517 = vunpack.c.l.b16 %v478
    %v518 = vunpack.c.l.b16 %v479
    %v519 = vunpack.c.l.b16 %v480
    %v520 = vunpack.c.l.b16 %v481
    %v521 = vunpack.c.l.b16 %v482
    %v522 = vunpack.c.l.b16 %v483
    %v523 = vunpack.c.l.b16 %v484
    %v524 = vunpack.c.l.b16 %v485
    %v525 = vunpack.c.l.b16 %v486
    %v526 = vunpack.c.l.b16 %v487
    %v527 = vunpack.c.l.b16 %v488
    %v528 = vpack.c.b16 %v513, %v512
    %v529 = vpack.c.b16 %v515, %v514
    %v530 = vpack.c.b16 %v517, %v516
    %v531 = vpack.c.b16 %v519, %v518
    %v532 = vpack.c.b16 %v521, %v520
    %v533 = vpack.c.b16 %v523, %v522
    %v534 = vpack.c.b16 %v525, %v524
    %v535 = vpack.c.b16 %v527, %v526
    %544 = vmatprep.subr.bf16.mxu0 0
    %545 = vmatpush1.bf16.msra.mxu0 %v535
    %546 = vmatprep.subr.bf16.mxu0 0
    %547 = vmatpush1.bf16.msra.mxu0 %v534
    %548 = vmatprep.subr.bf16.mxu0 0
    %549 = vmatpush1.bf16.msra.mxu0 %v533
    %550 = vmatprep.subr.bf16.mxu0 0
    %551 = vmatpush1.bf16.msra.mxu0 %v532
    %552 = vmatprep.subr.bf16.mxu0 0
    %553 = vmatpush1.bf16.msra.mxu0 %v531
    %554 = vmatprep.subr.bf16.mxu0 0
    %555 = vmatpush1.bf16.msra.mxu0 %v530
    %556 = vmatprep.subr.bf16.mxu0 0
    %557 = vmatpush1.bf16.msra.mxu0 %v529
    %558 = vmatprep.subr.bf16.mxu0 0
    %559 = vmatpush1.bf16.msra.mxu0 %v528
    %560 = vmatprep.subr.bf16.mxu0 0
    %561 = vmatpush2.bf16.msra.mxu0 0
    %562 = vmatprep.subr.bf16.mxu0 0
    %563 = vmatpush2.bf16.msra.mxu0 0
    %564 = vmatprep.subr.bf16.mxu0 0
    %565 = vmatpush2.bf16.msra.mxu0 0
    %566 = vmatprep.subr.bf16.mxu0 0
    %567 = vmatpush2.bf16.msra.mxu0 0
    %568 = vmatprep.subr.bf16.mxu0 0
    %569 = vmatpush2.bf16.msra.mxu0 0
    %570 = vmatprep.subr.bf16.mxu0 0
    %571 = vmatpush2.bf16.msra.mxu0 0
    %572 = vmatprep.subr.bf16.mxu0 0
    %573 = vmatpush2.bf16.msra.mxu0 0
    %574 = vmatprep.subr.bf16.mxu0 0
    %575 = vmatpush2.bf16.msra.mxu0 0
    %576 = vmatprep.mubr.bf16.mxu0 0
    %577 = vmatmul.mubr.bf16.gmra.mxu0 %v472
    %v578 = vpop.f32.mrf.mxu0
    %v579 = vadd.f32 %v494, %v578
    %v580 = vpop.f32.mrf.mxu0
    %v581 = vpop.f32.mrf.mxu0
    %v582 = vadd.f32 %v494, %v581
    %v583 = vpop.f32.mrf.mxu0
    %584 = vdwg.mxu0
    %585 = vst [vmem:[#allocation11] sm:$0xff] %v579
    %586 = vst [vmem:[#allocation11 + $0x8] sm:$0xff] %v582
    // Predicated region
    $region58: #{tpu_custom_call.1} parent=1 // pred_check
      _
    $region59: #{tpu_custom_call.1} parent=1 // pred_check_branch
      %588 = sbr.rel (0) target = $region61
    $region60: #{tpu_custom_call.1} parent=1 // pred_region
      %s590 = ssub.s32 256, 256
      %591 = vsyncadd [#allocation4], %s590
      %s592 = sshll.u32 [#allocation11], 4
      %s593 = int_to_ptr.vmem [resolvable:$true] %s592
      %598 = dma.vmem_to_hbm [thread:$0]  %s593, 256, %s9, [#allocation4], 128, 128, 8
    $region61: #{tpu_custom_call.1} parent=1 // pred_fallthru
      _
    // Predicated region
    $region62: #{tpu_custom_call.1} parent=1 // pred_check
      _
    $region63: #{tpu_custom_call.1} parent=1 // pred_check_branch
      %600 = sbr.rel (0) target = $region65
    $region64: #{tpu_custom_call.1} parent=1 // pred_region
      %601 = dma.done [#allocation4], 256
    $region65: #{tpu_custom_call.1} parent=1 // pred_fallthru
      _
    %602 = vsyncpa [#allocation3], 1
    %603 = vsyncpa [#allocation6], 1
    %604 = vsyncpa [#allocation9], 1
    %605 = vsyncpa [#allocation4], 1

// kernel: tpu_custom_call.1
$region0: #{tpu_custom_call.1}
  #allocation0 [shape = 'u32[]', space=smem, size = 0x4, offset = 0x4, fixed_abs, tag = 'smem constant byte address 0x4 - core index']
  #allocation1 [shape = 'u32[144,128]{1,0:T(1,128)}', space=vmem, size = 0x12000, scoped, tag = 'internal scratch']
  %s0 = inlined_call_operand.hbm [shape: bf16[16,128], index: 0, kind: input, shape index: {}]
  %s1 = inlined_call_operand.hbm [shape: bf16[128,128], index: 1, kind: input, shape index: {}]
  %s2 = inlined_call_operand.vmem [shape: f32[1,128], index: 2, kind: input, shape index: {}]
  %s3 = inlined_call_operand.hbm [shape: bf16[128,128], index: 3, kind: input, shape index: {}]
  %s4 = inlined_call_operand.vmem [shape: f32[1,128], index: 4, kind: input, shape index: {}]
  %s5 = inlined_call_operand.hbm [shape: bf16[128,128], index: 5, kind: input, shape index: {}]
  %s6 = inlined_call_operand.vmem [shape: f32[1,128], index: 6, kind: input, shape index: {}]
  %s7 = inlined_call_operand.hbm [shape: bf16[128,128], index: 7, kind: input, shape index: {}]
  %s8 = inlined_call_operand.vmem [shape: f32[1,128], index: 8, kind: input, shape index: {}]
  %s9 = inlined_call_operand.hbm [shape: f32[16,128], index: 9, kind: output, shape index: {}]
  %s10 = sld [smem:[#allocation0]]
  $region66: #{tpu_custom_call.1} parent=0
    _
  %s12 = ssub.s32 1, %s10
  %s13 = scalar_select 0, %s12, %s10
  $region1: #{tpu_custom_call.1} parent=0
    #allocation2 [shape = 'u8[4096]{0}', space=vmem, size = 0x1000, scoped, tag = 'input window, operand 0, single buffered']
    #allocation3 [shape = 's32[1]{0}', space=sflag, size = 0x4, scoped, tag = 'scoped memory for tpu_custom_call.1']
    #allocation4 [shape = 's32[1]{0}', space=sflag, size = 0x4, scoped, tag = 'scoped memory for tpu_custom_call.1']
    #allocation5 [shape = 'u8[32768]{0}', space=vmem, size = 0x8000, scoped, tag = 'input window, operand 1, single buffered']
    #allocation6 [shape = 's32[1]{0}', space=sflag, size = 0x4, scoped, tag = 'scoped memory for tpu_custom_call.1']
    #allocation7 [shape = 'u8[32768]{0}', space=vmem, size = 0x8000, scoped, tag = 'input window, operand 3, single buffered']
    #allocation8 [shape = 'u8[32768]{0}', space=vmem, size = 0x8000, scoped, tag = 'input window, operand 5, single buffered']
    #allocation9 [shape = 's32[1]{0}', space=sflag, size = 0x4, scoped, tag = 'scoped memory for tpu_custom_call.1']
    #allocation10 [shape = 'u8[32768]{0}', space=vmem, size = 0x8000, scoped, tag = 'input window, operand 7, single buffered']
    #allocation11 [shape = 'u8[8192]{0}', space=vmem, size = 0x2000, scoped, tag = 'output window, operand 0, single buffered']
    %14 = vsyncpa [#allocation3], 0
    %15 = vsyncpa [#allocation6], 0
    %16 = vsyncpa [#allocation9], 0
    %17 = vsyncpa [#allocation4], 0
    // Predicated region
    $region2: #{tpu_custom_call.1} parent=1 // pred_check
      _
    $region3: #{tpu_custom_call.1} parent=1 // pred_check_branch
      %19 = sbr.rel (0) target = $region5
    $region4: #{tpu_custom_call.1} parent=1 // pred_region
      %s21 = ssub.s32 128, 128
      %22 = vsyncadd [#allocation3], %s21
      %s23 = sshll.u32 [#allocation2], 4
      %s24 = int_to_ptr.vmem [resolvable:$true] %s23
      %29 = dma.hbm_to_vmem [thread:$0]  %s0, 128, %s24, [#allocation3], 64, 64, 4
    $region5: #{tpu_custom_call.1} parent=1 // pred_fallthru
      _
    // Predicated region
    $region6: #{tpu_custom_call.1} parent=1 // pred_check
      _
    $region7: #{tpu_custom_call.1} parent=1 // pred_check_branch
      %31 = sbr.rel (0) target = $region9
    $region8: #{tpu_custom_call.1} parent=1 // pred_region
      %s33 = ssub.s32 1024, 1024
      %34 = vsyncadd [#allocation6], %s33
      %s35 = sshll.u32 [#allocation5], 4
      %s36 = int_to_ptr.vmem [resolvable:$true] %s35
      %41 = dma.hbm_to_vmem [thread:$0]  %s1, 1024, %s36, [#allocation6], 64, 64, 4
    $region9: #{tpu_custom_call.1} parent=1 // pred_fallthru
      _
    // Predicated region
    $region10: #{tpu_custom_call.1} parent=1 // pred_check
      _
    $region11: #{tpu_custom_call.1} parent=1 // pred_check_branch
      %43 = sbr.rel (0) target = $region13
    $region12: #{tpu_custom_call.1} parent=1 // pred_region
      _
    $region13: #{tpu_custom_call.1} parent=1 // pred_fallthru
      _
    // Predicated region
    $region14: #{tpu_custom_call.1} parent=1 // pred_check
      _
    $region15: #{tpu_custom_call.1} parent=1 // pred_check_branch
      %45 = sbr.rel (0) target = $region17
    $region16: #{tpu_custom_call.1} parent=1 // pred_region
      %s47 = ssub.s32 1024, 1024
      %48 = vsyncadd [#allocation6], %s47
      %s49 = sshll.u32 [#allocation7], 4
      %s50 = int_to_ptr.vmem [resolvable:$true] %s49
      %55 = dma.hbm_to_vmem [thread:$0]  %s3, 1024, %s50, [#allocation6], 64, 64, 4
    $region17: #{tpu_custom_call.1} parent=1 // pred_fallthru
      _
    // Predicated region
    $region18: #{tpu_custom_call.1} parent=1 // pred_check
      _
    $region19: #{tpu_custom_call.1} parent=1 // pred_check_branch
      %57 = sbr.rel (0) target = $region21
    $region20: #{tpu_custom_call.1} parent=1 // pred_region
      _
    $region21: #{tpu_custom_call.1} parent=1 // pred_fallthru
      _
    // Predicated region
    $region22: #{tpu_custom_call.1} parent=1 // pred_check
      _
    $region23: #{tpu_custom_call.1} parent=1 // pred_check_branch
      %59 = sbr.rel (0) target = $region25
    $region24: #{tpu_custom_call.1} parent=1 // pred_region
      %s61 = ssub.s32 1024, 1024
      %62 = vsyncadd [#allocation9], %s61
      %s63 = sshll.u32 [#allocation8], 4
      %s64 = int_to_ptr.vmem [resolvable:$true] %s63
      %69 = dma.hbm_to_vmem [thread:$0]  %s5, 1024, %s64, [#allocation9], 64, 64, 4
    $region25: #{tpu_custom_call.1} parent=1 // pred_fallthru
      _
    // Predicated region
    $region26: #{tpu_custom_call.1} parent=1 // pred_check
      _
    $region27: #{tpu_custom_call.1} parent=1 // pred_check_branch
      %71 = sbr.rel (0) target = $region29
    $region28: #{tpu_custom_call.1} parent=1 // pred_region
      _
    $region29: #{tpu_custom_call.1} parent=1 // pred_fallthru
      _
    // Predicated region
    $region30: #{tpu_custom_call.1} parent=1 // pred_check
      _
    $region31: #{tpu_custom_call.1} parent=1 // pred_check_branch
      %73 = sbr.rel (0) target = $region33
    $region32: #{tpu_custom_call.1} parent=1 // pred_region
      %s75 = ssub.s32 1024, 1024
      %76 = vsyncadd [#allocation9], %s75
      %s77 = sshll.u32 [#allocation10], 4
      %s78 = int_to_ptr.vmem [resolvable:$true] %s77
      %83 = dma.hbm_to_vmem [thread:$0]  %s7, 1024, %s78, [#allocation9], 64, 64, 4
    $region33: #{tpu_custom_call.1} parent=1 // pred_fallthru
      _
    // Predicated region
    $region34: #{tpu_custom_call.1} parent=1 // pred_check
      _
    $region35: #{tpu_custom_call.1} parent=1 // pred_check_branch
      %85 = sbr.rel (0) target = $region37
    $region36: #{tpu_custom_call.1} parent=1 // pred_region
      _
    $region37: #{tpu_custom_call.1} parent=1 // pred_fallthru
      _
    // Predicated region
    $region38: #{tpu_custom_call.1} parent=1 // pred_check
      _
    $region39: #{tpu_custom_call.1} parent=1 // pred_check_branch
      %87 = sbr.rel (0) target = $region41
    $region40: #{tpu_custom_call.1} parent=1 // pred_region
      %88 = dma.done [#allocation3], 128
    $region41: #{tpu_custom_call.1} parent=1 // pred_fallthru
      _
    // Predicated region
    $region42: #{tpu_custom_call.1} parent=1 // pred_check
      _
    $region43: #{tpu_custom_call.1} parent=1 // pred_check_branch
      %90 = sbr.rel (0) target = $region45
    $region44: #{tpu_custom_call.1} parent=1 // pred_region
      %91 = dma.done [#allocation6], 1024
    $region45: #{tpu_custom_call.1} parent=1 // pred_fallthru
      _
    // Predicated region
    $region46: #{tpu_custom_call.1} parent=1 // pred_check
      _
    $region47: #{tpu_custom_call.1} parent=1 // pred_check_branch
      %93 = sbr.rel (0) target = $region49
    $region48: #{tpu_custom_call.1} parent=1 // pred_region
      %94 = dma.done [#allocation6], 1024
    $region49: #{tpu_custom_call.1} parent=1 // pred_fallthru
      _
    // Predicated region
    $region50: #{tpu_custom_call.1} parent=1 // pred_check
      _
    $region51: #{tpu_custom_call.1} parent=1 // pred_check_branch
      %96 = sbr.rel (0) target = $region53
    $region52: #{tpu_custom_call.1} parent=1 // pred_region
      %97 = dma.done [#allocation9], 1024
    $region53: #{tpu_custom_call.1} parent=1 // pred_fallthru
      _
    // Predicated region
    $region54: #{tpu_custom_call.1} parent=1 // pred_check
      _
    $region55: #{tpu_custom_call.1} parent=1 // pred_check_branch
      %99 = sbr.rel (0) target = $region57
    $region56: #{tpu_custom_call.1} parent=1 // pred_region
      %100 = dma.done [#allocation9], 1024
    $region57: #{tpu_custom_call.1} parent=1 // pred_fallthru
      _
    %v102 = vld [vmem:[#allocation2] sm:$0xf]
    %v103 = vld [vmem:[#allocation2 + $0x4] sm:$0xf]
    %v104 = vld [vmem:[#allocation5] sm:$0xf]
    %v105 = vld [vmem:[#allocation5 + $0x4] sm:$0xf]
    %v106 = vld [vmem:[#allocation5 + $0x8] sm:$0xf]
    %v107 = vld [vmem:[#allocation5 + $0xc] sm:$0xf]
    %v108 = vld [vmem:[#allocation5 + $0x10] sm:$0xf]
    %v109 = vld [vmem:[#allocation5 + $0x14] sm:$0xf]
    %v110 = vld [vmem:[#allocation5 + $0x18] sm:$0xf]
    %v111 = vld [vmem:[#allocation5 + $0x1c] sm:$0xf]
    %v112 = vld [vmem:[#allocation5 + $0x20] sm:$0xf]
    %v113 = vld [vmem:[#allocation5 + $0x24] sm:$0xf]
    %v114 = vld [vmem:[#allocation5 + $0x28] sm:$0xf]
    %v115 = vld [vmem:[#allocation5 + $0x2c] sm:$0xf]
    %v116 = vld [vmem:[#allocation5 + $0x30] sm:$0xf]
    %v117 = vld [vmem:[#allocation5 + $0x34] sm:$0xf]
    %v118 = vld [vmem:[#allocation5 + $0x38] sm:$0xf]
    %v119 = vld [vmem:[#allocation5 + $0x3c] sm:$0xf]
    %v120 = vld [vmem:[%s2] sm:$0x1]
    %v122 = vlaneseq
    %v123 = vshrl.u32 %v122, 7
    %v124 = vsub.s32 0, %v123
    %v125 = vrot.slane %v120, %v124
    %v129 = vunpack.c.l.b16 %v102
    %v130 = vunpack.c.l.b16 %v103
    %v131 = vpack.c.b16 %v130, %v129
    %v149 = vunpack.c.l.b16 %v104
    %v150 = vunpack.c.l.b16 %v105
    %v151 = vunpack.c.l.b16 %v106
    %v152 = vunpack.c.l.b16 %v107
    %v153 = vunpack.c.l.b16 %v108
    %v154 = vunpack.c.l.b16 %v109
    %v155 = vunpack.c.l.b16 %v110
    %v156 = vunpack.c.l.b16 %v111
    %v157 = vunpack.c.l.b16 %v112
    %v158 = vunpack.c.l.b16 %v113
    %v159 = vunpack.c.l.b16 %v114
    %v160 = vunpack.c.l.b16 %v115
    %v161 = vunpack.c.l.b16 %v116
    %v162 = vunpack.c.l.b16 %v117
    %v163 = vunpack.c.l.b16 %v118
    %v164 = vunpack.c.l.b16 %v119
    %v165 = vpack.c.b16 %v150, %v149
    %v166 = vpack.c.b16 %v152, %v151
    %v167 = vpack.c.b16 %v154, %v153
    %v168 = vpack.c.b16 %v156, %v155
    %v169 = vpack.c.b16 %v158, %v157
    %v170 = vpack.c.b16 %v160, %v159
    %v171 = vpack.c.b16 %v162, %v161
    %v172 = vpack.c.b16 %v164, %v163
    %181 = vmatprep.subr.bf16.mxu0 0
    %182 = vmatpush1.bf16.msra.mxu0 %v172
    %183 = vmatprep.subr.bf16.mxu0 0
    %184 = vmatpush1.bf16.msra.mxu0 %v171
    %185 = vmatprep.subr.bf16.mxu0 0
    %186 = vmatpush1.bf16.msra.mxu0 %v170
    %187 = vmatprep.subr.bf16.mxu0 0
    %188 = vmatpush1.bf16.msra.mxu0 %v169
    %189 = vmatprep.subr.bf16.mxu0 0
    %190 = vmatpush1.bf16.msra.mxu0 %v168
    %191 = vmatprep.subr.bf16.mxu0 0
    %192 = vmatpush1.bf16.msra.mxu0 %v167
    %193 = vmatprep.subr.bf16.mxu0 0
    %194 = vmatpush1.bf16.msra.mxu0 %v166
    %195 = vmatprep.subr.bf16.mxu0 0
    %196 = vmatpush1.bf16.msra.mxu0 %v165
    %197 = vmatprep.subr.bf16.mxu0 0
    %198 = vmatpush2.bf16.msra.mxu0 0
    %199 = vmatprep.subr.bf16.mxu0 0
    %200 = vmatpush2.bf16.msra.mxu0 0
    %201 = vmatprep.subr.bf16.mxu0 0
    %202 = vmatpush2.bf16.msra.mxu0 0
    %203 = vmatprep.subr.bf16.mxu0 0
    %204 = vmatpush2.bf16.msra.mxu0 0
    %205 = vmatprep.subr.bf16.mxu0 0
    %206 = vmatpush2.bf16.msra.mxu0 0
    %207 = vmatprep.subr.bf16.mxu0 0
    %208 = vmatpush2.bf16.msra.mxu0 0
    %209 = vmatprep.subr.bf16.mxu0 0
    %210 = vmatpush2.bf16.msra.mxu0 0
    %211 = vmatprep.subr.bf16.mxu0 0
    %212 = vmatpush2.bf16.msra.mxu0 0
    %213 = vmatprep.mubr.bf16.mxu0 0
    %214 = vmatmul.mubr.bf16.gmra.mxu0 %v131
    %v215 = vpop.f32.mrf.mxu0
    %v216 = vadd.f32 %v125, %v215
    %v217 = vpop.f32.mrf.mxu0
    %v218 = vpop.f32.mrf.mxu0
    %v219 = vadd.f32 %v125, %v218
    %v220 = vpop.f32.mrf.mxu0
    %221 = vdwg.mxu0
    %v222 = vmul.f32 %v216, 0.5
    %v223 = vmul.f32 %v219, 0.5
    %v224 = vtanh.pop %v222
    %v225 = vtanh.pop %v223
    %v226 = vadd.f32 %v224, 1.0
    %v227 = vadd.f32 %v225, 1.0
    %v228 = vmul.f32 %v226, 0.5
    %v229 = vmul.f32 %v227, 0.5
    %v230 = vpack.c.bf16 %v229, %v228
    %v231 = vld [vmem:[#allocation7] sm:$0xf]
    %v232 = vld [vmem:[#allocation7 + $0x4] sm:$0xf]
    %v233 = vld [vmem:[#allocation7 + $0x8] sm:$0xf]
    %v234 = vld [vmem:[#allocation7 + $0xc] sm:$0xf]
    %v235 = vld [vmem:[#allocation7 + $0x10] sm:$0xf]
    %v236 = vld [vmem:[#allocation7 + $0x14] sm:$0xf]
    %v237 = vld [vmem:[#allocation7 + $0x18] sm:$0xf]
    %v238 = vld [vmem:[#allocation7 + $0x1c] sm:$0xf]
    %v239 = vld [vmem:[#allocation7 + $0x20] sm:$0xf]
    %v240 = vld [vmem:[#allocation7 + $0x24] sm:$0xf]
    %v241 = vld [vmem:[#allocation7 + $0x28] sm:$0xf]
    %v242 = vld [vmem:[#allocation7 + $0x2c] sm:$0xf]
    %v243 = vld [vmem:[#allocation7 + $0x30] sm:$0xf]
    %v244 = vld [vmem:[#allocation7 + $0x34] sm:$0xf]
    %v245 = vld [vmem:[#allocation7 + $0x38] sm:$0xf]
    %v246 = vld [vmem:[#allocation7 + $0x3c] sm:$0xf]
    %v247 = vld [vmem:[%s4] sm:$0x1]
    %v249 = vlaneseq
    %v250 = vshrl.u32 %v249, 7
    %v251 = vsub.s32 0, %v250
    %v252 = vrot.slane %v247, %v251
    %v270 = vunpack.c.l.b16 %v231
    %v271 = vunpack.c.l.b16 %v232
    %v272 = vunpack.c.l.b16 %v233
    %v273 = vunpack.c.l.b16 %v234
    %v274 = vunpack.c.l.b16 %v235
    %v275 = vunpack.c.l.b16 %v236
    %v276 = vunpack.c.l.b16 %v237
    %v277 = vunpack.c.l.b16 %v238
    %v278 = vunpack.c.l.b16 %v239
    %v279 = vunpack.c.l.b16 %v240
    %v280 = vunpack.c.l.b16 %v241
    %v281 = vunpack.c.l.b16 %v242
    %v282 = vunpack.c.l.b16 %v243
    %v283 = vunpack.c.l.b16 %v244
    %v284 = vunpack.c.l.b16 %v245
    %v285 = vunpack.c.l.b16 %v246
    %v286 = vpack.c.b16 %v271, %v270
    %v287 = vpack.c.b16 %v273, %v272
    %v288 = vpack.c.b16 %v275, %v274
    %v289 = vpack.c.b16 %v277, %v276
    %v290 = vpack.c.b16 %v279, %v278
    %v291 = vpack.c.b16 %v281, %v280
    %v292 = vpack.c.b16 %v283, %v282
    %v293 = vpack.c.b16 %v285, %v284
    %302 = vmatprep.subr.bf16.mxu0 0
    %303 = vmatpush1.bf16.msra.mxu0 %v293
    %304 = vmatprep.subr.bf16.mxu0 0
    %305 = vmatpush1.bf16.msra.mxu0 %v292
    %306 = vmatprep.subr.bf16.mxu0 0
    %307 = vmatpush1.bf16.msra.mxu0 %v291
    %308 = vmatprep.subr.bf16.mxu0 0
    %309 = vmatpush1.bf16.msra.mxu0 %v290
    %310 = vmatprep.subr.bf16.mxu0 0
    %311 = vmatpush1.bf16.msra.mxu0 %v289
    %312 = vmatprep.subr.bf16.mxu0 0
    %313 = vmatpush1.bf16.msra.mxu0 %v288
    %314 = vmatprep.subr.bf16.mxu0 0
    %315 = vmatpush1.bf16.msra.mxu0 %v287
    %316 = vmatprep.subr.bf16.mxu0 0
    %317 = vmatpush1.bf16.msra.mxu0 %v286
    %318 = vmatprep.subr.bf16.mxu0 0
    %319 = vmatpush2.bf16.msra.mxu0 0
    %320 = vmatprep.subr.bf16.mxu0 0
    %321 = vmatpush2.bf16.msra.mxu0 0
    %322 = vmatprep.subr.bf16.mxu0 0
    %323 = vmatpush2.bf16.msra.mxu0 0
    %324 = vmatprep.subr.bf16.mxu0 0
    %325 = vmatpush2.bf16.msra.mxu0 0
    %326 = vmatprep.subr.bf16.mxu0 0
    %327 = vmatpush2.bf16.msra.mxu0 0
    %328 = vmatprep.subr.bf16.mxu0 0
    %329 = vmatpush2.bf16.msra.mxu0 0
    %330 = vmatprep.subr.bf16.mxu0 0
    %331 = vmatpush2.bf16.msra.mxu0 0
    %332 = vmatprep.subr.bf16.mxu0 0
    %333 = vmatpush2.bf16.msra.mxu0 0
    %334 = vmatprep.mubr.bf16.mxu0 0
    %335 = vmatmul.mubr.bf16.gmra.mxu0 %v230
    %v336 = vpop.f32.mrf.mxu0
    %v337 = vadd.f32 %v252, %v336
    %v338 = vpop.f32.mrf.mxu0
    %v339 = vpop.f32.mrf.mxu0
    %v340 = vadd.f32 %v252, %v339
    %v341 = vpop.f32.mrf.mxu0
    %342 = vdwg.mxu0
    %v343 = vmul.f32 %v337, 0.5
    %v344 = vmul.f32 %v340, 0.5
    %v345 = vtanh.pop %v343
    %v346 = vtanh.pop %v344
    %v347 = vadd.f32 %v345, 1.0
    %v348 = vadd.f32 %v346, 1.0
    %v349 = vmul.f32 %v347, 0.5
    %v350 = vmul.f32 %v348, 0.5
    %v351 = vpack.c.bf16 %v350, %v349
    %v352 = vld [vmem:[#allocation8] sm:$0xf]
    %v353 = vld [vmem:[#allocation8 + $0x4] sm:$0xf]
    %v354 = vld [vmem:[#allocation8 + $0x8] sm:$0xf]
    %v355 = vld [vmem:[#allocation8 + $0xc] sm:$0xf]
    %v356 = vld [vmem:[#allocation8 + $0x10] sm:$0xf]
    %v357 = vld [vmem:[#allocation8 + $0x14] sm:$0xf]
    %v358 = vld [vmem:[#allocation8 + $0x18] sm:$0xf]
    %v359 = vld [vmem:[#allocation8 + $0x1c] sm:$0xf]
    %v360 = vld [vmem:[#allocation8 + $0x20] sm:$0xf]
    %v361 = vld [vmem:[#allocation8 + $0x24] sm:$0xf]
    %v362 = vld [vmem:[#allocation8 + $0x28] sm:$0xf]
    %v363 = vld [vmem:[#allocation8 + $0x2c] sm:$0xf]
    %v364 = vld [vmem:[#allocation8 + $0x30] sm:$0xf]
    %v365 = vld [vmem:[#allocation8 + $0x34] sm:$0xf]
    %v366 = vld [vmem:[#allocation8 + $0x38] sm:$0xf]
    %v367 = vld [vmem:[#allocation8 + $0x3c] sm:$0xf]
    %v368 = vld [vmem:[%s6] sm:$0x1]
    %v370 = vlaneseq
    %v371 = vshrl.u32 %v370, 7
    %v372 = vsub.s32 0, %v371
    %v373 = vrot.slane %v368, %v372
    %v391 = vunpack.c.l.b16 %v352
    %v392 = vunpack.c.l.b16 %v353
    %v393 = vunpack.c.l.b16 %v354
    %v394 = vunpack.c.l.b16 %v355
    %v395 = vunpack.c.l.b16 %v356
    %v396 = vunpack.c.l.b16 %v357
    %v397 = vunpack.c.l.b16 %v358
    %v398 = vunpack.c.l.b16 %v359
    %v399 = vunpack.c.l.b16 %v360
    %v400 = vunpack.c.l.b16 %v361
    %v401 = vunpack.c.l.b16 %v362
    %v402 = vunpack.c.l.b16 %v363
    %v403 = vunpack.c.l.b16 %v364
    %v404 = vunpack.c.l.b16 %v365
    %v405 = vunpack.c.l.b16 %v366
    %v406 = vunpack.c.l.b16 %v367
    %v407 = vpack.c.b16 %v392, %v391
    %v408 = vpack.c.b16 %v394, %v393
    %v409 = vpack.c.b16 %v396, %v395
    %v410 = vpack.c.b16 %v398, %v397
    %v411 = vpack.c.b16 %v400, %v399
    %v412 = vpack.c.b16 %v402, %v401
    %v413 = vpack.c.b16 %v404, %v403
    %v414 = vpack.c.b16 %v406, %v405
    %423 = vmatprep.subr.bf16.mxu0 0
    %424 = vmatpush1.bf16.msra.mxu0 %v414
    %425 = vmatprep.subr.bf16.mxu0 0
    %426 = vmatpush1.bf16.msra.mxu0 %v413
    %427 = vmatprep.subr.bf16.mxu0 0
    %428 = vmatpush1.bf16.msra.mxu0 %v412
    %429 = vmatprep.subr.bf16.mxu0 0
    %430 = vmatpush1.bf16.msra.mxu0 %v411
    %431 = vmatprep.subr.bf16.mxu0 0
    %432 = vmatpush1.bf16.msra.mxu0 %v410
    %433 = vmatprep.subr.bf16.mxu0 0
    %434 = vmatpush1.bf16.msra.mxu0 %v409
    %435 = vmatprep.subr.bf16.mxu0 0
    %436 = vmatpush1.bf16.msra.mxu0 %v408
    %437 = vmatprep.subr.bf16.mxu0 0
    %438 = vmatpush1.bf16.msra.mxu0 %v407
    %439 = vmatprep.subr.bf16.mxu0 0
    %440 = vmatpush2.bf16.msra.mxu0 0
    %441 = vmatprep.subr.bf16.mxu0 0
    %442 = vmatpush2.bf16.msra.mxu0 0
    %443 = vmatprep.subr.bf16.mxu0 0
    %444 = vmatpush2.bf16.msra.mxu0 0
    %445 = vmatprep.subr.bf16.mxu0 0
    %446 = vmatpush2.bf16.msra.mxu0 0
    %447 = vmatprep.subr.bf16.mxu0 0
    %448 = vmatpush2.bf16.msra.mxu0 0
    %449 = vmatprep.subr.bf16.mxu0 0
    %450 = vmatpush2.bf16.msra.mxu0 0
    %451 = vmatprep.subr.bf16.mxu0 0
    %452 = vmatpush2.bf16.msra.mxu0 0
    %453 = vmatprep.subr.bf16.mxu0 0
    %454 = vmatpush2.bf16.msra.mxu0 0
    %455 = vmatprep.mubr.bf16.mxu0 0
    %456 = vmatmul.mubr.bf16.gmra.mxu0 %v351
    %v457 = vpop.f32.mrf.mxu0
    %v458 = vadd.f32 %v373, %v457
    %v459 = vpop.f32.mrf.mxu0
    %v460 = vpop.f32.mrf.mxu0
    %v461 = vadd.f32 %v373, %v460
    %v462 = vpop.f32.mrf.mxu0
    %463 = vdwg.mxu0
    %v464 = vmul.f32 %v458, 0.5
    %v465 = vmul.f32 %v461, 0.5
    %v466 = vtanh.pop %v464
    %v467 = vtanh.pop %v465
    %v468 = vadd.f32 %v466, 1.0
    %v469 = vadd.f32 %v467, 1.0
    %v470 = vmul.f32 %v468, 0.5
    %v471 = vmul.f32 %v469, 0.5
    %v472 = vpack.c.bf16 %v471, %v470
    %v473 = vld [vmem:[#allocation10] sm:$0xf]
    %v474 = vld [vmem:[#allocation10 + $0x4] sm:$0xf]
    %v475 = vld [vmem:[#allocation10 + $0x8] sm:$0xf]
    %v476 = vld [vmem:[#allocation10 + $0xc] sm:$0xf]
    %v477 = vld [vmem:[#allocation10 + $0x10] sm:$0xf]
    %v478 = vld [vmem:[#allocation10 + $0x14] sm:$0xf]
    %v479 = vld [vmem:[#allocation10 + $0x18] sm:$0xf]
    %v480 = vld [vmem:[#allocation10 + $0x1c] sm:$0xf]
    %v481 = vld [vmem:[#allocation10 + $0x20] sm:$0xf]
    %v482 = vld [vmem:[#allocation10 + $0x24] sm:$0xf]
    %v483 = vld [vmem:[#allocation10 + $0x28] sm:$0xf]
    %v484 = vld [vmem:[#allocation10 + $0x2c] sm:$0xf]
    %v485 = vld [vmem:[#allocation10 + $0x30] sm:$0xf]
    %v486 = vld [vmem:[#allocation10 + $0x34] sm:$0xf]
    %v487 = vld [vmem:[#allocation10 + $0x38] sm:$0xf]
    %v488 = vld [vmem:[#allocation10 + $0x3c] sm:$0xf]
    %v489 = vld [vmem:[%s8] sm:$0x1]
    %v491 = vlaneseq
    %v492 = vshrl.u32 %v491, 7
    %v493 = vsub.s32 0, %v492
    %v494 = vrot.slane %v489, %v493
    %v512 = vunpack.c.l.b16 %v473
    %v513 = vunpack.c.l.b16 %v474
    %v514 = vunpack.c.l.b16 %v475
    %v515 = vunpack.c.l.b16 %v476
    %v516 = vunpack.c.l.b16 %v477
    %v517 = vunpack.c.l.b16 %v478
    %v518 = vunpack.c.l.b16 %v479
    %v519 = vunpack.c.l.b16 %v480
    %v520 = vunpack.c.l.b16 %v481
    %v521 = vunpack.c.l.b16 %v482
    %v522 = vunpack.c.l.b16 %v483
    %v523 = vunpack.c.l.b16 %v484
    %v524 = vunpack.c.l.b16 %v485
    %v525 = vunpack.c.l.b16 %v486
    %v526 = vunpack.c.l.b16 %v487
    %v527 = vunpack.c.l.b16 %v488
    %v528 = vpack.c.b16 %v513, %v512
    %v529 = vpack.c.b16 %v515, %v514
    %v530 = vpack.c.b16 %v517, %v516
    %v531 = vpack.c.b16 %v519, %v518
    %v532 = vpack.c.b16 %v521, %v520
    %v533 = vpack.c.b16 %v523, %v522
    %v534 = vpack.c.b16 %v525, %v524
    %v535 = vpack.c.b16 %v527, %v526
    %544 = vmatprep.subr.bf16.mxu0 0
    %545 = vmatpush1.bf16.msra.mxu0 %v535
    %546 = vmatprep.subr.bf16.mxu0 0
    %547 = vmatpush1.bf16.msra.mxu0 %v534
    %548 = vmatprep.subr.bf16.mxu0 0
    %549 = vmatpush1.bf16.msra.mxu0 %v533
    %550 = vmatprep.subr.bf16.mxu0 0
    %551 = vmatpush1.bf16.msra.mxu0 %v532
    %552 = vmatprep.subr.bf16.mxu0 0
    %553 = vmatpush1.bf16.msra.mxu0 %v531
    %554 = vmatprep.subr.bf16.mxu0 0
    %555 = vmatpush1.bf16.msra.mxu0 %v530
    %556 = vmatprep.subr.bf16.mxu0 0
    %557 = vmatpush1.bf16.msra.mxu0 %v529
    %558 = vmatprep.subr.bf16.mxu0 0
    %559 = vmatpush1.bf16.msra.mxu0 %v528
    %560 = vmatprep.subr.bf16.mxu0 0
    %561 = vmatpush2.bf16.msra.mxu0 0
    %562 = vmatprep.subr.bf16.mxu0 0
    %563 = vmatpush2.bf16.msra.mxu0 0
    %564 = vmatprep.subr.bf16.mxu0 0
    %565 = vmatpush2.bf16.msra.mxu0 0
    %566 = vmatprep.subr.bf16.mxu0 0
    %567 = vmatpush2.bf16.msra.mxu0 0
    %568 = vmatprep.subr.bf16.mxu0 0
    %569 = vmatpush2.bf16.msra.mxu0 0
    %570 = vmatprep.subr.bf16.mxu0 0
    %571 = vmatpush2.bf16.msra.mxu0 0
    %572 = vmatprep.subr.bf16.mxu0 0
    %573 = vmatpush2.bf16.msra.mxu0 0
    %574 = vmatprep.subr.bf16.mxu0 0
    %575 = vmatpush2.bf16.msra.mxu0 0
    %576 = vmatprep.mubr.bf16.mxu0 0
    %577 = vmatmul.mubr.bf16.gmra.mxu0 %v472
    %v578 = vpop.f32.mrf.mxu0
    %v579 = vadd.f32 %v494, %v578
    %v580 = vpop.f32.mrf.mxu0
    %v581 = vpop.f32.mrf.mxu0
    %v582 = vadd.f32 %v494, %v581
    %v583 = vpop.f32.mrf.mxu0
    %584 = vdwg.mxu0
    %585 = vst [vmem:[#allocation11] sm:$0xff] %v579
    %586 = vst [vmem:[#allocation11 + $0x8] sm:$0xff] %v582
    // Predicated region
    $region58: #{tpu_custom_call.1} parent=1 // pred_check
      _
    $region59: #{tpu_custom_call.1} parent=1 // pred_check_branch
      %588 = sbr.rel (0) target = $region61
    $region60: #{tpu_custom_call.1} parent=1 // pred_region
      %s590 = ssub.s32 256, 256
      %591 = vsyncadd [#allocation4], %s590
      %s592 = sshll.u32 [#allocation11], 4
      %s593 = int_to_ptr.vmem [resolvable:$true] %s592
      %598 = dma.vmem_to_hbm [thread:$0]  %s593, 256, %s9, [#allocation4], 128, 128, 8
    $region61: #{tpu_custom_call.1} parent=1 // pred_fallthru
      _
    // Predicated region
    $region62: #{tpu_custom_call.1} parent=1 // pred_check
      _
    $region63: #{tpu_custom_call.1} parent=1 // pred_check_branch
      %600 = sbr.rel (0) target = $region65
    $region64: #{tpu_custom_call.1} parent=1 // pred_region
      %601 = dma.done [#allocation4], 256
    $region65: #{tpu_custom_call.1} parent=1 // pred_fallthru
      _
    %602 = vsyncpa [#allocation3], 1
    %603 = vsyncpa [#allocation6], 1
    %604 = vsyncpa [#allocation9], 1
    %605 = vsyncpa [#allocation4], 1

</llo_original>
